<compile_context>
chip_gen: v5e
topology: v5e:2x2
jax: 0.10.0
libtpu: 0.0.40
codegen_flags: <defaults>
</compile_context>

<pallas_src>
import jax
import jax.numpy as jnp
from jax.experimental import pallas as pl
from jax.experimental.pallas import tpu as pltpu  # noqa: F401  (kept for TPU-specific extensions)


INPUT_FEATURES = 3 * 32 * 32  # 3072
LANE = 128
SUBLANE = 8


def _round_up(x, m):
    return ((x + m - 1) // m) * m


def _fused_heads_kernel(x_ref, w_ref, b_ref, o_ref):
    """Single MXU pass: y = x @ W + b with bf16 operands, f32 accumulate."""
    acc = jnp.dot(x_ref[...], w_ref[...], preferred_element_type=jnp.float32)
    o_ref[...] = acc + b_ref[...]  # (1, N_pad) f32 bias broadcasts over rows


@jax.jit
def fused_linear_heads(x_flat, w, b):
    """x_flat: (B, F) f32, w: (F, N_pad) bf16, b: (1, N_pad) f32 -> (B, N_pad) f32."""
    B, F = x_flat.shape
    _, N_pad = w.shape
    assert N_pad % LANE == 0

    # Pad the batch to a full sublane multiple (8) so x / out blocks are dense.
    B_pad = max(SUBLANE, _round_up(B, SUBLANE))
    x_bf16 = x_flat.astype(jnp.bfloat16)
    if B_pad != B:
        x_bf16 = jnp.zeros((B_pad, F), jnp.bfloat16).at[:B].set(x_bf16)

    y = pl.pallas_call(
        _fused_heads_kernel,
        out_shape=jax.ShapeDtypeStruct((B_pad, N_pad), jnp.float32),
        grid=(1,),  # whole problem in one block: nothing worth pipelining
        in_specs=[
            pl.BlockSpec((B_pad, F), lambda i: (0, 0)),     # x resident (bf16, ~48 KiB)
            pl.BlockSpec((F, N_pad), lambda i: (0, 0)),     # full fused W (bf16, ~1.5 MiB)
            pl.BlockSpec((1, N_pad), lambda i: (0, 0)),     # bias (f32)
        ],
        out_specs=pl.BlockSpec((B_pad, N_pad), lambda i: (0, 0)),
        cost_estimate=pl.CostEstimate(
            flops=2 * B_pad * F * N_pad,
            transcendentals=0,
            bytes_accessed=(B_pad * F * 2          # x bf16
                            + F * N_pad * 2        # W bf16
                            + N_pad * 4            # bias f32
                            + B_pad * N_pad * 4),  # out f32
        ),
    )(x_bf16, w, b)

    return y[:B]


def init_tiny_model_params(num_classes_per_task, key):
    """Deterministic per-task Linear(3072, num_classes) params.

    Weights are stored (F, N) (torch W^T), zero-padded to a 128-lane multiple
    per task, concatenated along N into one fused matrix, and cast to bf16.
    Bias stays f32.
    """
    w_blocks, b_blocks = [], []
    slices = {}
    offset = 0
    for i, (task_key, num_classes) in enumerate(sorted(num_classes_per_task.items())):
        kw, kb = jax.random.split(jax.random.fold_in(key, i))
        bound = 1.0 / jnp.sqrt(jnp.float32(INPUT_FEATURES))
        w = jax.random.uniform(
            kw, (INPUT_FEATURES, num_classes), jnp.float32, -bound, bound
        )
        b = jax.random.uniform(kb, (num_classes,), jnp.float32, -bound, bound)

        n_pad = max(LANE, _round_up(num_classes, LANE))
        w_blocks.append(
            jnp.zeros((INPUT_FEATURES, n_pad), jnp.float32).at[:, :num_classes].set(w)
        )
        b_blocks.append(jnp.zeros((n_pad,), jnp.float32).at[:num_classes].set(b))
        slices[task_key] = (offset, num_classes)
        offset += n_pad

    return {
        "w": jnp.concatenate(w_blocks, axis=1).astype(jnp.bfloat16),  # (F, N_pad_total)
        "b": jnp.concatenate(b_blocks)[None, :],                       # (1, N_pad_total) f32
        "slices": slices,                                              # task -> (offset, n_classes)
    }


def tiny_model_forward(params, image_tensor_batch):
    """image_tensor_batch: (B, 3, 32, 32) NCHW -> dict of (B, num_classes)."""
    batch_size = image_tensor_batch.shape[0]
    # torch .view(batch_size, -1) on contiguous NCHW == row-major reshape.
    x_flat = image_tensor_batch.reshape(batch_size, -1).astype(jnp.float32)

    y = fused_linear_heads(x_flat, params["w"], params["b"])

    # TODO(synk): consumers that can handle the padded (B, 256) slab should
    # slice lazily; per-task views are kept here to match the torch dict API.
    outputs = {}
    for task_key, (off, num_classes) in params["slices"].items():
        outputs[task_key] = y[:, off:off + num_classes]
    return outputs


if __name__ == "__main__":
    key = jax.random.PRNGKey(0)

    num_classes_per_task = {"task_a": 10, "task_b": 5}
    params = init_tiny_model_params(num_classes_per_task, jax.random.fold_in(key, 100))

    # Small batch of NCHW images, as the forward implies (B, 3, 32, 32).
    x = jax.random.normal(jax.random.fold_in(key, 200), (2, 3, 32, 32), jnp.float32)

    outputs = tiny_model_forward(params, x)
    outputs = jax.block_until_ready(outputs)

    # Reference check in plain JAX, using the SAME bf16-rounded operands the
    # kernel sees (only the quantization is shared; matmul/bias are f32 here).
    x_flat = x.reshape(x.shape[0], -1).astype(jnp.float32)
    x_bf = x_flat.astype(jnp.bfloat16).astype(jnp.float32)
    ok = True
    for task_key, (off, num_classes) in params["slices"].items():
        w_ref = params["w"][:, off:off + num_classes].astype(jnp.float32)
        b_ref = params["b"][0, off:off + num_classes]
        ref = x_bf @ w_ref + b_ref
        ok &= bool(jnp.allclose(outputs[task_key], ref, atol=2e-3, rtol=2e-3))
        ok &= outputs[task_key].shape == (2, num_classes_per_task[task_key])

    if ok:
        print("KERNEL_OK")
    else:
        print("MISMATCH")
</pallas_src>

<mosaic_0001>
module attributes {stable_mosaic.version = 11 : i64} {
  func.func @_fused_heads_kernel(%arg0: i32, %arg1: memref<8x3072xbf16, #tpu.memory_space<vmem>>, %arg2: memref<3072x256xbf16, #tpu.memory_space<vmem>>, %arg3: memref<1x256xf32, #tpu.memory_space<vmem>>, %arg4: memref<8x256xf32, #tpu.memory_space<vmem>>) attributes {dimension_semantics = [#tpu.dimension_semantics<arbitrary>], iteration_bounds = array<i64: 1>, scalar_prefetch = 0 : i64, scratch_operands = 0 : i64, tpu.core_type = #tpu.core_type<tc>, window_params = [{pipeline_mode = #tpu.pipeline_mode<synchronous>, transform_indices = @transform_0, window_bounds = array<i64: 8, 3072>}, {pipeline_mode = #tpu.pipeline_mode<synchronous>, transform_indices = @transform_1, window_bounds = array<i64: 3072, 256>}, {pipeline_mode = #tpu.pipeline_mode<synchronous>, transform_indices = @transform_2, window_bounds = array<i64: 1, 256>}, {pipeline_mode = #tpu.pipeline_mode<synchronous>, transform_indices = @transform_3, window_bounds = array<i64: 8, 256>}]} {
    %c0 = arith.constant 0 : index
    %c0_0 = arith.constant 0 : index
    %0 = vector.load %arg1[%c0, %c0_0] : memref<8x3072xbf16, #tpu.memory_space<vmem>>, vector<8x3072xbf16>
    %c0_1 = arith.constant 0 : index
    %c0_2 = arith.constant 0 : index
    %1 = vector.load %arg2[%c0_1, %c0_2] : memref<3072x256xbf16, #tpu.memory_space<vmem>>, vector<3072x256xbf16>
    %cst = arith.constant dense<0.000000e+00> : vector<8x256xf32>
    %2 = tpu.matmul %0, %1, %cst {dimension_numbers = #tpu.dot_dimension_numbers<[1], [0], [0], [1], [0, 0, 1, 1], [], []>} : vector<8x3072xbf16>, vector<3072x256xbf16>, vector<8x256xf32> -> vector<8x256xf32>
    %c0_3 = arith.constant 0 : index
    %c0_4 = arith.constant 0 : index
    %3 = vector.load %arg3[%c0_3, %c0_4] : memref<1x256xf32, #tpu.memory_space<vmem>>, vector<1x256xf32>
    %4 = vector.broadcast %3 : vector<1x256xf32> to vector<8x256xf32>
    %5 = arith.addf %2, %4 : vector<8x256xf32>
    %c0_5 = arith.constant 0 : index
    %c0_6 = arith.constant 0 : index
    %6 = vector.load %arg4[%c0_5, %c0_6] : memref<8x256xf32, #tpu.memory_space<vmem>>, vector<8x256xf32>
    tpu.vector_store %arg4[%c0_5, %c0_6], %5 {strides = array<i32>} : memref<8x256xf32, #tpu.memory_space<vmem>>, vector<8x256xf32>,
    return
  }
  func.func @transform_0(%arg0: i32) -> (i32, i32) {
    %c0_i32 = arith.constant 0 : i32
    %c0_i32_0 = arith.constant 0 : i32
    %c0_i32_1 = arith.constant 0 : i32
    return %c0_i32, %c0_i32_0 : i32, i32
  }
  func.func @transform_1(%arg0: i32) -> (i32, i32) {
    %c0_i32 = arith.constant 0 : i32
    %c0_i32_0 = arith.constant 0 : i32
    %c0_i32_1 = arith.constant 0 : i32
    return %c0_i32, %c0_i32_0 : i32, i32
  }
  func.func @transform_2(%arg0: i32) -> (i32, i32) {
    %c0_i32 = arith.constant 0 : i32
    %c0_i32_0 = arith.constant 0 : i32
    %c0_i32_1 = arith.constant 0 : i32
    return %c0_i32, %c0_i32_0 : i32, i32
  }
  func.func @transform_3(%arg0: i32) -> (i32, i32) {
    %c0_i32 = arith.constant 0 : i32
    %c0_i32_0 = arith.constant 0 : i32
    %c0_i32_1 = arith.constant 0 : i32
    return %c0_i32, %c0_i32_0 : i32, i32
  }
}

</mosaic_0001>

<llo_original>
// kernel: fused_linear_heads.1
$region0: #{fused_linear_heads.1}
  #allocation0 [shape = 'u32[]', space=smem, size = 0x4, offset = 0x4, fixed_abs, tag = 'smem constant byte address 0x4 - core index']
  #allocation1 [shape = 'u32[72,128]{1,0:T(1,128)}', space=vmem, size = 0x9000, scoped, tag = 'internal scratch']
  %s0 = inlined_call_operand.vmem [shape: bf16[8,3072], index: 0, kind: input, shape index: {}]
  %s1 = inlined_call_operand.hbm [shape: bf16[3072,256], index: 1, kind: input, shape index: {}]
  %s2 = inlined_call_operand.hbm [shape: f32[1,256], index: 2, kind: input, shape index: {}]
  %s3 = inlined_call_operand.vmem [shape: f32[8,256], index: 3, kind: output, shape index: {}]
  %s4 = sld [smem:[#allocation0]]
  $region30: #{fused_linear_heads.1} parent=0
    _
  %s6 = ssub.s32 1, %s4
  %s7 = scalar_select 0, %s6, %s4
  $region1: #{fused_linear_heads.1} parent=0
    #allocation2 [shape = 'u8[1572864]{0}', space=vmem, size = 0x180000, scoped, tag = 'input window, operand 1, single buffered']
    #allocation3 [shape = 's32[1]{0}', space=sflag, size = 0x4, scoped, tag = 'scoped memory for fused_linear_heads.1']
    #allocation4 [shape = 'u8[1024]{0}', space=vmem, size = 0x400, scoped, tag = 'input window, operand 2, single buffered']
    #allocation5 [shape = 's32[1]{0}', space=sflag, size = 0x4, scoped, tag = 'scoped memory for fused_linear_heads.1']
    %8 = vsyncpa [#allocation3], 0
    %9 = vsyncpa [#allocation5], 0
    // Predicated region
    $region2: #{fused_linear_heads.1} parent=1 // pred_check
      _
    $region3: #{fused_linear_heads.1} parent=1 // pred_check_branch
      %11 = sbr.rel (0) target = $region5
    $region4: #{fused_linear_heads.1} parent=1 // pred_region
      _
    $region5: #{fused_linear_heads.1} parent=1 // pred_fallthru
      _
    // Predicated region
    $region6: #{fused_linear_heads.1} parent=1 // pred_check
      _
    $region7: #{fused_linear_heads.1} parent=1 // pred_check_branch
      %13 = sbr.rel (0) target = $region9
    $region8: #{fused_linear_heads.1} parent=1 // pred_region
      %15 = vsyncadd [#allocation3], 0
      %s16 = sshll.u32 %s1, 4
      %s17 = int_to_ptr.hbm [resolvable:$true] %s16
      %s18 = sshll.u32 [#allocation2], 4
      %s19 = int_to_ptr.vmem [resolvable:$true] %s18
      %24 = dma.hbm_to_vmem [thread:$0]  %s17, 49152, %s19, [#allocation3], 128, 128, 8
    $region9: #{fused_linear_heads.1} parent=1 // pred_fallthru
      _
    // Predicated region
    $region10: #{fused_linear_heads.1} parent=1 // pred_check
      _
    $region11: #{fused_linear_heads.1} parent=1 // pred_check_branch
      %26 = sbr.rel (0) target = $region13
    $region12: #{fused_linear_heads.1} parent=1 // pred_region
      %28 = vsyncadd [#allocation5], 0
      %s30 = sshll.u32 %s2, 4
      %s31 = int_to_ptr.hbm [resolvable:$true] %s30
      %s32 = sshll.u32 [#allocation4], 4
      %s33 = int_to_ptr.vmem [resolvable:$true] %s32
      %35 = dma.hbm_to_vmem [thread:$0]  %s31, 32, %s33, [#allocation5]
    $region13: #{fused_linear_heads.1} parent=1 // pred_fallthru
      _
    // Predicated region
    $region14: #{fused_linear_heads.1} parent=1 // pred_check
      _
    $region15: #{fused_linear_heads.1} parent=1 // pred_check_branch
      %37 = sbr.rel (0) target = $region17
    $region16: #{fused_linear_heads.1} parent=1 // pred_region
      %39 = dma.done [#allocation3], 49152
    $region17: #{fused_linear_heads.1} parent=1 // pred_fallthru
      _
    // Predicated region
    $region18: #{fused_linear_heads.1} parent=1 // pred_check
      _
    $region19: #{fused_linear_heads.1} parent=1 // pred_check_branch
      %41 = sbr.rel (0) target = $region21
    $region20: #{fused_linear_heads.1} parent=1 // pred_region
      %43 = dma.done [#allocation5], 32
    $region21: #{fused_linear_heads.1} parent=1 // pred_fallthru
      _
    %v44 = vld [vmem:[%s0] sm:$0xff]
    %v45 = vld [vmem:[%s0 + $0x8] sm:$0xff]
    %v46 = vld [vmem:[%s0 + $0x10] sm:$0xff]
    %v47 = vld [vmem:[%s0 + $0x18] sm:$0xff]
    %v48 = vld [vmem:[%s0 + $0x20] sm:$0xff]
    %v49 = vld [vmem:[%s0 + $0x28] sm:$0xff]
    %v50 = vld [vmem:[%s0 + $0x30] sm:$0xff]
    %v51 = vld [vmem:[%s0 + $0x38] sm:$0xff]
    %v52 = vld [vmem:[%s0 + $0x40] sm:$0xff]
    %v53 = vld [vmem:[%s0 + $0x48] sm:$0xff]
    %v54 = vld [vmem:[%s0 + $0x50] sm:$0xff]
    %v55 = vld [vmem:[%s0 + $0x58] sm:$0xff]
    %v56 = vld [vmem:[#allocation2] sm:$0xff]
    %v57 = vld [vmem:[#allocation2 + $0x8] sm:$0xff]
    %v58 = vld [vmem:[#allocation2 + $0x10] sm:$0xff]
    %v59 = vld [vmem:[#allocation2 + $0x18] sm:$0xff]
    %v60 = vld [vmem:[#allocation2 + $0x20] sm:$0xff]
    %v61 = vld [vmem:[#allocation2 + $0x28] sm:$0xff]
    %v62 = vld [vmem:[#allocation2 + $0x30] sm:$0xff]
    %v63 = vld [vmem:[#allocation2 + $0x38] sm:$0xff]
    %v64 = vld [vmem:[#allocation2 + $0x40] sm:$0xff]
    %v65 = vld [vmem:[#allocation2 + $0x48] sm:$0xff]
    %v66 = vld [vmem:[#allocation2 + $0x50] sm:$0xff]
    %v67 = vld [vmem:[#allocation2 + $0x58] sm:$0xff]
    %v68 = vld [vmem:[#allocation2 + $0x60] sm:$0xff]
    %v69 = vld [vmem:[#allocation2 + $0x68] sm:$0xff]
    %v70 = vld [vmem:[#allocation2 + $0x70] sm:$0xff]
    %v71 = vld [vmem:[#allocation2 + $0x78] sm:$0xff]
    %v72 = vld [vmem:[#allocation2 + $0x80] sm:$0xff]
    %v73 = vld [vmem:[#allocation2 + $0x88] sm:$0xff]
    %v74 = vld [vmem:[#allocation2 + $0x90] sm:$0xff]
    %v75 = vld [vmem:[#allocation2 + $0x98] sm:$0xff]
    %v76 = vld [vmem:[#allocation2 + $0xa0] sm:$0xff]
    %v77 = vld [vmem:[#allocation2 + $0xa8] sm:$0xff]
    %v78 = vld [vmem:[#allocation2 + $0xb0] sm:$0xff]
    %v79 = vld [vmem:[#allocation2 + $0xb8] sm:$0xff]
    %v80 = vld [vmem:[#allocation2 + $0xc0] sm:$0xff]
    %v81 = vld [vmem:[#allocation2 + $0xc8] sm:$0xff]
    %v82 = vld [vmem:[#allocation2 + $0xd0] sm:$0xff]
    %v83 = vld [vmem:[#allocation2 + $0xd8] sm:$0xff]
    %v84 = vld [vmem:[#allocation2 + $0xe0] sm:$0xff]
    %v85 = vld [vmem:[#allocation2 + $0xe8] sm:$0xff]
    %v86 = vld [vmem:[#allocation2 + $0xf0] sm:$0xff]
    %v87 = vld [vmem:[#allocation2 + $0xf8] sm:$0xff]
    %v88 = vld [vmem:[#allocation2 + $0x100] sm:$0xff]
    %v89 = vld [vmem:[#allocation2 + $0x108] sm:$0xff]
    %v90 = vld [vmem:[#allocation2 + $0x110] sm:$0xff]
    %v91 = vld [vmem:[#allocation2 + $0x118] sm:$0xff]
    %v92 = vld [vmem:[#allocation2 + $0x120] sm:$0xff]
    %v93 = vld [vmem:[#allocation2 + $0x128] sm:$0xff]
    %v94 = vld [vmem:[#allocation2 + $0x130] sm:$0xff]
    %v95 = vld [vmem:[#allocation2 + $0x138] sm:$0xff]
    %v96 = vld [vmem:[#allocation2 + $0x140] sm:$0xff]
    %v97 = vld [vmem:[#allocation2 + $0x148] sm:$0xff]
    %v98 = vld [vmem:[#allocation2 + $0x150] sm:$0xff]
    %v99 = vld [vmem:[#allocation2 + $0x158] sm:$0xff]
    %v100 = vld [vmem:[#allocation2 + $0x160] sm:$0xff]
    %v101 = vld [vmem:[#allocation2 + $0x168] sm:$0xff]
    %v102 = vld [vmem:[#allocation2 + $0x170] sm:$0xff]
    %v103 = vld [vmem:[#allocation2 + $0x178] sm:$0xff]
    %v104 = vld [vmem:[#allocation2 + $0x180] sm:$0xff]
    %v105 = vld [vmem:[#allocation2 + $0x188] sm:$0xff]
    %v106 = vld [vmem:[#allocation2 + $0x190] sm:$0xff]
    %v107 = vld [vmem:[#allocation2 + $0x198] sm:$0xff]
    %v108 = vld [vmem:[#allocation2 + $0x1a0] sm:$0xff]
    %v109 = vld [vmem:[#allocation2 + $0x1a8] sm:$0xff]
    %v110 = vld [vmem:[#allocation2 + $0x1b0] sm:$0xff]
    %v111 = vld [vmem:[#allocation2 + $0x1b8] sm:$0xff]
    %v112 = vld [vmem:[#allocation2 + $0x1c0] sm:$0xff]
    %v113 = vld [vmem:[#allocation2 + $0x1c8] sm:$0xff]
    %v114 = vld [vmem:[#allocation2 + $0x1d0] sm:$0xff]
    %v115 = vld [vmem:[#allocation2 + $0x1d8] sm:$0xff]
    %v116 = vld [vmem:[#allocation2 + $0x1e0] sm:$0xff]
    %v117 = vld [vmem:[#allocation2 + $0x1e8] sm:$0xff]
    %v118 = vld [vmem:[#allocation2 + $0x1f0] sm:$0xff]
    %v119 = vld [vmem:[#allocation2 + $0x1f8] sm:$0xff]
    %v120 = vld [vmem:[#allocation2 + $0x200] sm:$0xff]
    %v121 = vld [vmem:[#allocation2 + $0x208] sm:$0xff]
    %v122 = vld [vmem:[#allocation2 + $0x210] sm:$0xff]
    %v123 = vld [vmem:[#allocation2 + $0x218] sm:$0xff]
    %v124 = vld [vmem:[#allocation2 + $0x220] sm:$0xff]
    %v125 = vld [vmem:[#allocation2 + $0x228] sm:$0xff]
    %v126 = vld [vmem:[#allocation2 + $0x230] sm:$0xff]
    %v127 = vld [vmem:[#allocation2 + $0x238] sm:$0xff]
    %v128 = vld [vmem:[#allocation2 + $0x240] sm:$0xff]
    %v129 = vld [vmem:[#allocation2 + $0x248] sm:$0xff]
    %v130 = vld [vmem:[#allocation2 + $0x250] sm:$0xff]
    %v131 = vld [vmem:[#allocation2 + $0x258] sm:$0xff]
    %v132 = vld [vmem:[#allocation2 + $0x260] sm:$0xff]
    %v133 = vld [vmem:[#allocation2 + $0x268] sm:$0xff]
    %v134 = vld [vmem:[#allocation2 + $0x270] sm:$0xff]
    %v135 = vld [vmem:[#allocation2 + $0x278] sm:$0xff]
    %v136 = vld [vmem:[#allocation2 + $0x280] sm:$0xff]
    %v137 = vld [vmem:[#allocation2 + $0x288] sm:$0xff]
    %v138 = vld [vmem:[#allocation2 + $0x290] sm:$0xff]
    %v139 = vld [vmem:[#allocation2 + $0x298] sm:$0xff]
    %v140 = vld [vmem:[#allocation2 + $0x2a0] sm:$0xff]
    %v141 = vld [vmem:[#allocation2 + $0x2a8] sm:$0xff]
    %v142 = vld [vmem:[#allocation2 + $0x2b0] sm:$0xff]
    %v143 = vld [vmem:[#allocation2 + $0x2b8] sm:$0xff]
    %v144 = vld [vmem:[#allocation2 + $0x2c0] sm:$0xff]
    %v145 = vld [vmem:[#allocation2 + $0x2c8] sm:$0xff]
    %v146 = vld [vmem:[#allocation2 + $0x2d0] sm:$0xff]
    %v147 = vld [vmem:[#allocation2 + $0x2d8] sm:$0xff]
    %v148 = vld [vmem:[#allocation2 + $0x2e0] sm:$0xff]
    %v149 = vld [vmem:[#allocation2 + $0x2e8] sm:$0xff]
    %v150 = vld [vmem:[#allocation2 + $0x2f0] sm:$0xff]
    %v151 = vld [vmem:[#allocation2 + $0x2f8] sm:$0xff]
    %v152 = vld [vmem:[#allocation2 + $0x300] sm:$0xff]
    %v153 = vld [vmem:[#allocation2 + $0x308] sm:$0xff]
    %v154 = vld [vmem:[#allocation2 + $0x310] sm:$0xff]
    %v155 = vld [vmem:[#allocation2 + $0x318] sm:$0xff]
    %v156 = vld [vmem:[#allocation2 + $0x320] sm:$0xff]
    %v157 = vld [vmem:[#allocation2 + $0x328] sm:$0xff]
    %v158 = vld [vmem:[#allocation2 + $0x330] sm:$0xff]
    %v159 = vld [vmem:[#allocation2 + $0x338] sm:$0xff]
    %v160 = vld [vmem:[#allocation2 + $0x340] sm:$0xff]
    %v161 = vld [vmem:[#allocation2 + $0x348] sm:$0xff]
    %v162 = vld [vmem:[#allocation2 + $0x350] sm:$0xff]
    %v163 = vld [vmem:[#allocation2 + $0x358] sm:$0xff]
    %v164 = vld [vmem:[#allocation2 + $0x360] sm:$0xff]
    %v165 = vld [vmem:[#allocation2 + $0x368] sm:$0xff]
    %v166 = vld [vmem:[#allocation2 + $0x370] sm:$0xff]
    %v167 = vld [vmem:[#allocation2 + $0x378] sm:$0xff]
    %v168 = vld [vmem:[#allocation2 + $0x380] sm:$0xff]
    %v169 = vld [vmem:[#allocation2 + $0x388] sm:$0xff]
    %v170 = vld [vmem:[#allocation2 + $0x390] sm:$0xff]
    %v171 = vld [vmem:[#allocation2 + $0x398] sm:$0xff]
    %v172 = vld [vmem:[#allocation2 + $0x3a0] sm:$0xff]
    %v173 = vld [vmem:[#allocation2 + $0x3a8] sm:$0xff]
    %v174 = vld [vmem:[#allocation2 + $0x3b0] sm:$0xff]
    %v175 = vld [vmem:[#allocation2 + $0x3b8] sm:$0xff]
    %v176 = vld [vmem:[#allocation2 + $0x3c0] sm:$0xff]
    %v177 = vld [vmem:[#allocation2 + $0x3c8] sm:$0xff]
    %v178 = vld [vmem:[#allocation2 + $0x3d0] sm:$0xff]
    %v179 = vld [vmem:[#allocation2 + $0x3d8] sm:$0xff]
    %v180 = vld [vmem:[#allocation2 + $0x3e0] sm:$0xff]
    %v181 = vld [vmem:[#allocation2 + $0x3e8] sm:$0xff]
    %v182 = vld [vmem:[#allocation2 + $0x3f0] sm:$0xff]
    %v183 = vld [vmem:[#allocation2 + $0x3f8] sm:$0xff]
    %v184 = vld [vmem:[#allocation2 + $0x400] sm:$0xff]
    %v185 = vld [vmem:[#allocation2 + $0x408] sm:$0xff]
    %v186 = vld [vmem:[#allocation2 + $0x410] sm:$0xff]
    %v187 = vld [vmem:[#allocation2 + $0x418] sm:$0xff]
    %v188 = vld [vmem:[#allocation2 + $0x420] sm:$0xff]
    %v189 = vld [vmem:[#allocation2 + $0x428] sm:$0xff]
    %v190 = vld [vmem:[#allocation2 + $0x430] sm:$0xff]
    %v191 = vld [vmem:[#allocation2 + $0x438] sm:$0xff]
    %v192 = vld [vmem:[#allocation2 + $0x440] sm:$0xff]
    %v193 = vld [vmem:[#allocation2 + $0x448] sm:$0xff]
    %v194 = vld [vmem:[#allocation2 + $0x450] sm:$0xff]
    %v195 = vld [vmem:[#allocation2 + $0x458] sm:$0xff]
    %v196 = vld [vmem:[#allocation2 + $0x460] sm:$0xff]
    %v197 = vld [vmem:[#allocation2 + $0x468] sm:$0xff]
    %v198 = vld [vmem:[#allocation2 + $0x470] sm:$0xff]
    %v199 = vld [vmem:[#allocation2 + $0x478] sm:$0xff]
    %v200 = vld [vmem:[#allocation2 + $0x480] sm:$0xff]
    %v201 = vld [vmem:[#allocation2 + $0x488] sm:$0xff]
    %v202 = vld [vmem:[#allocation2 + $0x490] sm:$0xff]
    %v203 = vld [vmem:[#allocation2 + $0x498] sm:$0xff]
    %v204 = vld [vmem:[#allocation2 + $0x4a0] sm:$0xff]
    %v205 = vld [vmem:[#allocation2 + $0x4a8] sm:$0xff]
    %v206 = vld [vmem:[#allocation2 + $0x4b0] sm:$0xff]
    %v207 = vld [vmem:[#allocation2 + $0x4b8] sm:$0xff]
    %v208 = vld [vmem:[#allocation2 + $0x4c0] sm:$0xff]
    %v209 = vld [vmem:[#allocation2 + $0x4c8] sm:$0xff]
    %v210 = vld [vmem:[#allocation2 + $0x4d0] sm:$0xff]
    %v211 = vld [vmem:[#allocation2 + $0x4d8] sm:$0xff]
    %v212 = vld [vmem:[#allocation2 + $0x4e0] sm:$0xff]
    %v213 = vld [vmem:[#allocation2 + $0x4e8] sm:$0xff]
    %v214 = vld [vmem:[#allocation2 + $0x4f0] sm:$0xff]
    %v215 = vld [vmem:[#allocation2 + $0x4f8] sm:$0xff]
    %v216 = vld [vmem:[#allocation2 + $0x500] sm:$0xff]
    %v217 = vld [vmem:[#allocation2 + $0x508] sm:$0xff]
    %v218 = vld [vmem:[#allocation2 + $0x510] sm:$0xff]
    %v219 = vld [vmem:[#allocation2 + $0x518] sm:$0xff]
    %v220 = vld [vmem:[#allocation2 + $0x520] sm:$0xff]
    %v221 = vld [vmem:[#allocation2 + $0x528] sm:$0xff]
    %v222 = vld [vmem:[#allocation2 + $0x530] sm:$0xff]
    %v223 = vld [vmem:[#allocation2 + $0x538] sm:$0xff]
    %v224 = vld [vmem:[#allocation2 + $0x540] sm:$0xff]
    %v225 = vld [vmem:[#allocation2 + $0x548] sm:$0xff]
    %v226 = vld [vmem:[#allocation2 + $0x550] sm:$0xff]
    %v227 = vld [vmem:[#allocation2 + $0x558] sm:$0xff]
    %v228 = vld [vmem:[#allocation2 + $0x560] sm:$0xff]
    %v229 = vld [vmem:[#allocation2 + $0x568] sm:$0xff]
    %v230 = vld [vmem:[#allocation2 + $0x570] sm:$0xff]
    %v231 = vld [vmem:[#allocation2 + $0x578] sm:$0xff]
    %v232 = vld [vmem:[#allocation2 + $0x580] sm:$0xff]
    %v233 = vld [vmem:[#allocation2 + $0x588] sm:$0xff]
    %v234 = vld [vmem:[#allocation2 + $0x590] sm:$0xff]
    %v235 = vld [vmem:[#allocation2 + $0x598] sm:$0xff]
    %v236 = vld [vmem:[#allocation2 + $0x5a0] sm:$0xff]
    %v237 = vld [vmem:[#allocation2 + $0x5a8] sm:$0xff]
    %v238 = vld [vmem:[#allocation2 + $0x5b0] sm:$0xff]
    %v239 = vld [vmem:[#allocation2 + $0x5b8] sm:$0xff]
    %v240 = vld [vmem:[#allocation2 + $0x5c0] sm:$0xff]
    %v241 = vld [vmem:[#allocation2 + $0x5c8] sm:$0xff]
    %v242 = vld [vmem:[#allocation2 + $0x5d0] sm:$0xff]
    %v243 = vld [vmem:[#allocation2 + $0x5d8] sm:$0xff]
    %v244 = vld [vmem:[#allocation2 + $0x5e0] sm:$0xff]
    %v245 = vld [vmem:[#allocation2 + $0x5e8] sm:$0xff]
    %v246 = vld [vmem:[#allocation2 + $0x5f0] sm:$0xff]
    %v247 = vld [vmem:[#allocation2 + $0x5f8] sm:$0xff]
    %v248 = vld [vmem:[#allocation2 + $0x600] sm:$0xff]
    %v249 = vld [vmem:[#allocation2 + $0x608] sm:$0xff]
    %v250 = vld [vmem:[#allocation2 + $0x610] sm:$0xff]
    %v251 = vld [vmem:[#allocation2 + $0x618] sm:$0xff]
    %v252 = vld [vmem:[#allocation2 + $0x620] sm:$0xff]
    %v253 = vld [vmem:[#allocation2 + $0x628] sm:$0xff]
    %v254 = vld [vmem:[#allocation2 + $0x630] sm:$0xff]
    %v255 = vld [vmem:[#allocation2 + $0x638] sm:$0xff]
    %v256 = vld [vmem:[#allocation2 + $0x640] sm:$0xff]
    %v257 = vld [vmem:[#allocation2 + $0x648] sm:$0xff]
    %v258 = vld [vmem:[#allocation2 + $0x650] sm:$0xff]
    %v259 = vld [vmem:[#allocation2 + $0x658] sm:$0xff]
    %v260 = vld [vmem:[#allocation2 + $0x660] sm:$0xff]
    %v261 = vld [vmem:[#allocation2 + $0x668] sm:$0xff]
    %v262 = vld [vmem:[#allocation2 + $0x670] sm:$0xff]
    %v263 = vld [vmem:[#allocation2 + $0x678] sm:$0xff]
    %v264 = vld [vmem:[#allocation2 + $0x680] sm:$0xff]
    %v265 = vld [vmem:[#allocation2 + $0x688] sm:$0xff]
    %v266 = vld [vmem:[#allocation2 + $0x690] sm:$0xff]
    %v267 = vld [vmem:[#allocation2 + $0x698] sm:$0xff]
    %v268 = vld [vmem:[#allocation2 + $0x6a0] sm:$0xff]
    %v269 = vld [vmem:[#allocation2 + $0x6a8] sm:$0xff]
    %v270 = vld [vmem:[#allocation2 + $0x6b0] sm:$0xff]
    %v271 = vld [vmem:[#allocation2 + $0x6b8] sm:$0xff]
    %v272 = vld [vmem:[#allocation2 + $0x6c0] sm:$0xff]
    %v273 = vld [vmem:[#allocation2 + $0x6c8] sm:$0xff]
    %v274 = vld [vmem:[#allocation2 + $0x6d0] sm:$0xff]
    %v275 = vld [vmem:[#allocation2 + $0x6d8] sm:$0xff]
    %v276 = vld [vmem:[#allocation2 + $0x6e0] sm:$0xff]
    %v277 = vld [vmem:[#allocation2 + $0x6e8] sm:$0xff]
    %v278 = vld [vmem:[#allocation2 + $0x6f0] sm:$0xff]
    %v279 = vld [vmem:[#allocation2 + $0x6f8] sm:$0xff]
    %v280 = vld [vmem:[#allocation2 + $0x700] sm:$0xff]
    %v281 = vld [vmem:[#allocation2 + $0x708] sm:$0xff]
    %v282 = vld [vmem:[#allocation2 + $0x710] sm:$0xff]
    %v283 = vld [vmem:[#allocation2 + $0x718] sm:$0xff]
    %v284 = vld [vmem:[#allocation2 + $0x720] sm:$0xff]
    %v285 = vld [vmem:[#allocation2 + $0x728] sm:$0xff]
    %v286 = vld [vmem:[#allocation2 + $0x730] sm:$0xff]
    %v287 = vld [vmem:[#allocation2 + $0x738] sm:$0xff]
    %v288 = vld [vmem:[#allocation2 + $0x740] sm:$0xff]
    %v289 = vld [vmem:[#allocation2 + $0x748] sm:$0xff]
    %v290 = vld [vmem:[#allocation2 + $0x750] sm:$0xff]
    %v291 = vld [vmem:[#allocation2 + $0x758] sm:$0xff]
    %v292 = vld [vmem:[#allocation2 + $0x760] sm:$0xff]
    %v293 = vld [vmem:[#allocation2 + $0x768] sm:$0xff]
    %v294 = vld [vmem:[#allocation2 + $0x770] sm:$0xff]
    %v295 = vld [vmem:[#allocation2 + $0x778] sm:$0xff]
    %v296 = vld [vmem:[#allocation2 + $0x780] sm:$0xff]
    %v297 = vld [vmem:[#allocation2 + $0x788] sm:$0xff]
    %v298 = vld [vmem:[#allocation2 + $0x790] sm:$0xff]
    %v299 = vld [vmem:[#allocation2 + $0x798] sm:$0xff]
    %v300 = vld [vmem:[#allocation2 + $0x7a0] sm:$0xff]
    %v301 = vld [vmem:[#allocation2 + $0x7a8] sm:$0xff]
    %v302 = vld [vmem:[#allocation2 + $0x7b0] sm:$0xff]
    %v303 = vld [vmem:[#allocation2 + $0x7b8] sm:$0xff]
    %v304 = vld [vmem:[#allocation2 + $0x7c0] sm:$0xff]
    %v305 = vld [vmem:[#allocation2 + $0x7c8] sm:$0xff]
    %v306 = vld [vmem:[#allocation2 + $0x7d0] sm:$0xff]
    %v307 = vld [vmem:[#allocation2 + $0x7d8] sm:$0xff]
    %v308 = vld [vmem:[#allocation2 + $0x7e0] sm:$0xff]
    %v309 = vld [vmem:[#allocation2 + $0x7e8] sm:$0xff]
    %v310 = vld [vmem:[#allocation2 + $0x7f0] sm:$0xff]
    %v311 = vld [vmem:[#allocation2 + $0x7f8] sm:$0xff]
    %v312 = vld [vmem:[#allocation2 + $0x800] sm:$0xff]
    %v313 = vld [vmem:[#allocation2 + $0x808] sm:$0xff]
    %v314 = vld [vmem:[#allocation2 + $0x810] sm:$0xff]
    %v315 = vld [vmem:[#allocation2 + $0x818] sm:$0xff]
    %v316 = vld [vmem:[#allocation2 + $0x820] sm:$0xff]
    %v317 = vld [vmem:[#allocation2 + $0x828] sm:$0xff]
    %v318 = vld [vmem:[#allocation2 + $0x830] sm:$0xff]
    %v319 = vld [vmem:[#allocation2 + $0x838] sm:$0xff]
    %v320 = vld [vmem:[#allocation2 + $0x840] sm:$0xff]
    %v321 = vld [vmem:[#allocation2 + $0x848] sm:$0xff]
    %v322 = vld [vmem:[#allocation2 + $0x850] sm:$0xff]
    %v323 = vld [vmem:[#allocation2 + $0x858] sm:$0xff]
    %v324 = vld [vmem:[#allocation2 + $0x860] sm:$0xff]
    %v325 = vld [vmem:[#allocation2 + $0x868] sm:$0xff]
    %v326 = vld [vmem:[#allocation2 + $0x870] sm:$0xff]
    %v327 = vld [vmem:[#allocation2 + $0x878] sm:$0xff]
    %v328 = vld [vmem:[#allocation2 + $0x880] sm:$0xff]
    %v329 = vld [vmem:[#allocation2 + $0x888] sm:$0xff]
    %v330 = vld [vmem:[#allocation2 + $0x890] sm:$0xff]
    %v331 = vld [vmem:[#allocation2 + $0x898] sm:$0xff]
    %v332 = vld [vmem:[#allocation2 + $0x8a0] sm:$0xff]
    %v333 = vld [vmem:[#allocation2 + $0x8a8] sm:$0xff]
    %v334 = vld [vmem:[#allocation2 + $0x8b0] sm:$0xff]
    %v335 = vld [vmem:[#allocation2 + $0x8b8] sm:$0xff]
    %v336 = vld [vmem:[#allocation2 + $0x8c0] sm:$0xff]
    %v337 = vld [vmem:[#allocation2 + $0x8c8] sm:$0xff]
    %v338 = vld [vmem:[#allocation2 + $0x8d0] sm:$0xff]
    %v339 = vld [vmem:[#allocation2 + $0x8d8] sm:$0xff]
    %v340 = vld [vmem:[#allocation2 + $0x8e0] sm:$0xff]
    %v341 = vld [vmem:[#allocation2 + $0x8e8] sm:$0xff]
    %v342 = vld [vmem:[#allocation2 + $0x8f0] sm:$0xff]
    %v343 = vld [vmem:[#allocation2 + $0x8f8] sm:$0xff]
    %v344 = vld [vmem:[#allocation2 + $0x900] sm:$0xff]
    %v345 = vld [vmem:[#allocation2 + $0x908] sm:$0xff]
    %v346 = vld [vmem:[#allocation2 + $0x910] sm:$0xff]
    %v347 = vld [vmem:[#allocation2 + $0x918] sm:$0xff]
    %v348 = vld [vmem:[#allocation2 + $0x920] sm:$0xff]
    %v349 = vld [vmem:[#allocation2 + $0x928] sm:$0xff]
    %v350 = vld [vmem:[#allocation2 + $0x930] sm:$0xff]
    %v351 = vld [vmem:[#allocation2 + $0x938] sm:$0xff]
    %v352 = vld [vmem:[#allocation2 + $0x940] sm:$0xff]
    %v353 = vld [vmem:[#allocation2 + $0x948] sm:$0xff]
    %v354 = vld [vmem:[#allocation2 + $0x950] sm:$0xff]
    %v355 = vld [vmem:[#allocation2 + $0x958] sm:$0xff]
    %v356 = vld [vmem:[#allocation2 + $0x960] sm:$0xff]
    %v357 = vld [vmem:[#allocation2 + $0x968] sm:$0xff]
    %v358 = vld [vmem:[#allocation2 + $0x970] sm:$0xff]
    %v359 = vld [vmem:[#allocation2 + $0x978] sm:$0xff]
    %v360 = vld [vmem:[#allocation2 + $0x980] sm:$0xff]
    %v361 = vld [vmem:[#allocation2 + $0x988] sm:$0xff]
    %v362 = vld [vmem:[#allocation2 + $0x990] sm:$0xff]
    %v363 = vld [vmem:[#allocation2 + $0x998] sm:$0xff]
    %v364 = vld [vmem:[#allocation2 + $0x9a0] sm:$0xff]
    %v365 = vld [vmem:[#allocation2 + $0x9a8] sm:$0xff]
    %v366 = vld [vmem:[#allocation2 + $0x9b0] sm:$0xff]
    %v367 = vld [vmem:[#allocation2 + $0x9b8] sm:$0xff]
    %v368 = vld [vmem:[#allocation2 + $0x9c0] sm:$0xff]
    %v369 = vld [vmem:[#allocation2 + $0x9c8] sm:$0xff]
    %v370 = vld [vmem:[#allocation2 + $0x9d0] sm:$0xff]
    %v371 = vld [vmem:[#allocation2 + $0x9d8] sm:$0xff]
    %v372 = vld [vmem:[#allocation2 + $0x9e0] sm:$0xff]
    %v373 = vld [vmem:[#allocation2 + $0x9e8] sm:$0xff]
    %v374 = vld [vmem:[#allocation2 + $0x9f0] sm:$0xff]
    %v375 = vld [vmem:[#allocation2 + $0x9f8] sm:$0xff]
    %v376 = vld [vmem:[#allocation2 + $0xa00] sm:$0xff]
    %v377 = vld [vmem:[#allocation2 + $0xa08] sm:$0xff]
    %v378 = vld [vmem:[#allocation2 + $0xa10] sm:$0xff]
    %v379 = vld [vmem:[#allocation2 + $0xa18] sm:$0xff]
    %v380 = vld [vmem:[#allocation2 + $0xa20] sm:$0xff]
    %v381 = vld [vmem:[#allocation2 + $0xa28] sm:$0xff]
    %v382 = vld [vmem:[#allocation2 + $0xa30] sm:$0xff]
    %v383 = vld [vmem:[#allocation2 + $0xa38] sm:$0xff]
    %v384 = vld [vmem:[#allocation2 + $0xa40] sm:$0xff]
    %v385 = vld [vmem:[#allocation2 + $0xa48] sm:$0xff]
    %v386 = vld [vmem:[#allocation2 + $0xa50] sm:$0xff]
    %v387 = vld [vmem:[#allocation2 + $0xa58] sm:$0xff]
    %v388 = vld [vmem:[#allocation2 + $0xa60] sm:$0xff]
    %v389 = vld [vmem:[#allocation2 + $0xa68] sm:$0xff]
    %v390 = vld [vmem:[#allocation2 + $0xa70] sm:$0xff]
    %v391 = vld [vmem:[#allocation2 + $0xa78] sm:$0xff]
    %v392 = vld [vmem:[#allocation2 + $0xa80] sm:$0xff]
    %v393 = vld [vmem:[#allocation2 + $0xa88] sm:$0xff]
    %v394 = vld [vmem:[#allocation2 + $0xa90] sm:$0xff]
    %v395 = vld [vmem:[#allocation2 + $0xa98] sm:$0xff]
    %v396 = vld [vmem:[#allocation2 + $0xaa0] sm:$0xff]
    %v397 = vld [vmem:[#allocation2 + $0xaa8] sm:$0xff]
    %v398 = vld [vmem:[#allocation2 + $0xab0] sm:$0xff]
    %v399 = vld [vmem:[#allocation2 + $0xab8] sm:$0xff]
    %v400 = vld [vmem:[#allocation2 + $0xac0] sm:$0xff]
    %v401 = vld [vmem:[#allocation2 + $0xac8] sm:$0xff]
    %v402 = vld [vmem:[#allocation2 + $0xad0] sm:$0xff]
    %v403 = vld [vmem:[#allocation2 + $0xad8] sm:$0xff]
    %v404 = vld [vmem:[#allocation2 + $0xae0] sm:$0xff]
    %v405 = vld [vmem:[#allocation2 + $0xae8] sm:$0xff]
    %v406 = vld [vmem:[#allocation2 + $0xaf0] sm:$0xff]
    %v407 = vld [vmem:[#allocation2 + $0xaf8] sm:$0xff]
    %v408 = vld [vmem:[#allocation2 + $0xb00] sm:$0xff]
    %v409 = vld [vmem:[#allocation2 + $0xb08] sm:$0xff]
    %v410 = vld [vmem:[#allocation2 + $0xb10] sm:$0xff]
    %v411 = vld [vmem:[#allocation2 + $0xb18] sm:$0xff]
    %v412 = vld [vmem:[#allocation2 + $0xb20] sm:$0xff]
    %v413 = vld [vmem:[#allocation2 + $0xb28] sm:$0xff]
    %v414 = vld [vmem:[#allocation2 + $0xb30] sm:$0xff]
    %v415 = vld [vmem:[#allocation2 + $0xb38] sm:$0xff]
    %v416 = vld [vmem:[#allocation2 + $0xb40] sm:$0xff]
    %v417 = vld [vmem:[#allocation2 + $0xb48] sm:$0xff]
    %v418 = vld [vmem:[#allocation2 + $0xb50] sm:$0xff]
    %v419 = vld [vmem:[#allocation2 + $0xb58] sm:$0xff]
    %v420 = vld [vmem:[#allocation2 + $0xb60] sm:$0xff]
    %v421 = vld [vmem:[#allocation2 + $0xb68] sm:$0xff]
    %v422 = vld [vmem:[#allocation2 + $0xb70] sm:$0xff]
    %v423 = vld [vmem:[#allocation2 + $0xb78] sm:$0xff]
    %v424 = vld [vmem:[#allocation2 + $0xb80] sm:$0xff]
    %v425 = vld [vmem:[#allocation2 + $0xb88] sm:$0xff]
    %v426 = vld [vmem:[#allocation2 + $0xb90] sm:$0xff]
    %v427 = vld [vmem:[#allocation2 + $0xb98] sm:$0xff]
    %v428 = vld [vmem:[#allocation2 + $0xba0] sm:$0xff]
    %v429 = vld [vmem:[#allocation2 + $0xba8] sm:$0xff]
    %v430 = vld [vmem:[#allocation2 + $0xbb0] sm:$0xff]
    %v431 = vld [vmem:[#allocation2 + $0xbb8] sm:$0xff]
    %v432 = vld [vmem:[#allocation2 + $0xbc0] sm:$0xff]
    %v433 = vld [vmem:[#allocation2 + $0xbc8] sm:$0xff]
    %v434 = vld [vmem:[#allocation2 + $0xbd0] sm:$0xff]
    %v435 = vld [vmem:[#allocation2 + $0xbd8] sm:$0xff]
    %v436 = vld [vmem:[#allocation2 + $0xbe0] sm:$0xff]
    %v437 = vld [vmem:[#allocation2 + $0xbe8] sm:$0xff]
    %v438 = vld [vmem:[#allocation2 + $0xbf0] sm:$0xff]
    %v439 = vld [vmem:[#allocation2 + $0xbf8] sm:$0xff]
    %v440 = vld [vmem:[#allocation4] sm:$0x3]
    %v442 = vperm.slane %v440, 0
    %v443 = vperm.slane %v440, 1
    %v458 = vunpack.c.l.b16 %v44
    %v459 = vunpack.c.h.b16 %v44
    %v460 = vunpack.c.l.b16 %v45
    %v461 = vunpack.c.h.b16 %v45
    %v462 = vunpack.c.l.b16 %v46
    %v463 = vunpack.c.h.b16 %v46
    %v464 = vunpack.c.l.b16 %v47
    %v465 = vunpack.c.h.b16 %v47
    %v466 = vunpack.c.l.b16 %v48
    %v467 = vunpack.c.h.b16 %v48
    %v468 = vunpack.c.l.b16 %v49
    %v469 = vunpack.c.h.b16 %v49
    %v470 = vunpack.c.l.b16 %v50
    %v471 = vunpack.c.h.b16 %v50
    %v472 = vunpack.c.l.b16 %v51
    %v473 = vunpack.c.h.b16 %v51
    %v474 = vunpack.c.l.b16 %v52
    %v475 = vunpack.c.h.b16 %v52
    %v476 = vunpack.c.l.b16 %v53
    %v477 = vunpack.c.h.b16 %v53
    %v478 = vunpack.c.l.b16 %v54
    %v479 = vunpack.c.h.b16 %v54
    %v480 = vunpack.c.l.b16 %v55
    %v481 = vunpack.c.h.b16 %v55
    %v482 = vpack.c.b16 %v458, %v458
    %v483 = vpack.c.b16 %v459, %v459
    %v484 = vpack.c.b16 %v460, %v460
    %v485 = vpack.c.b16 %v461, %v461
    %v486 = vpack.c.b16 %v462, %v462
    %v487 = vpack.c.b16 %v463, %v463
    %v488 = vpack.c.b16 %v464, %v464
    %v489 = vpack.c.b16 %v465, %v465
    %v490 = vpack.c.b16 %v466, %v466
    %v491 = vpack.c.b16 %v467, %v467
    %v492 = vpack.c.b16 %v468, %v468
    %v493 = vpack.c.b16 %v469, %v469
    %v494 = vpack.c.b16 %v470, %v470
    %v495 = vpack.c.b16 %v471, %v471
    %v496 = vpack.c.b16 %v472, %v472
    %v497 = vpack.c.b16 %v473, %v473
    %v498 = vpack.c.b16 %v474, %v474
    %v499 = vpack.c.b16 %v475, %v475
    %v500 = vpack.c.b16 %v476, %v476
    %v501 = vpack.c.b16 %v477, %v477
    %v502 = vpack.c.b16 %v478, %v478
    %v503 = vpack.c.b16 %v479, %v479
    %v504 = vpack.c.b16 %v480, %v480
    %v505 = vpack.c.b16 %v481, %v481
    %v914 = vunpack.c.l.b16 %v56
    %v915 = vunpack.c.h.b16 %v56
    %v916 = vunpack.c.l.b16 %v57
    %v917 = vunpack.c.h.b16 %v57
    %v918 = vunpack.c.l.b16 %v58
    %v919 = vunpack.c.h.b16 %v58
    %v920 = vunpack.c.l.b16 %v59
    %v921 = vunpack.c.h.b16 %v59
    %v922 = vunpack.c.l.b16 %v60
    %v923 = vunpack.c.h.b16 %v60
    %v924 = vunpack.c.l.b16 %v61
    %v925 = vunpack.c.h.b16 %v61
    %v926 = vunpack.c.l.b16 %v62
    %v927 = vunpack.c.h.b16 %v62
    %v928 = vunpack.c.l.b16 %v63
    %v929 = vunpack.c.h.b16 %v63
    %v930 = vunpack.c.l.b16 %v64
    %v931 = vunpack.c.h.b16 %v64
    %v932 = vunpack.c.l.b16 %v65
    %v933 = vunpack.c.h.b16 %v65
    %v934 = vunpack.c.l.b16 %v66
    %v935 = vunpack.c.h.b16 %v66
    %v936 = vunpack.c.l.b16 %v67
    %v937 = vunpack.c.h.b16 %v67
    %v938 = vunpack.c.l.b16 %v68
    %v939 = vunpack.c.h.b16 %v68
    %v940 = vunpack.c.l.b16 %v69
    %v941 = vunpack.c.h.b16 %v69
    %v942 = vunpack.c.l.b16 %v70
    %v943 = vunpack.c.h.b16 %v70
    %v944 = vunpack.c.l.b16 %v71
    %v945 = vunpack.c.h.b16 %v71
    %v946 = vunpack.c.l.b16 %v72
    %v947 = vunpack.c.h.b16 %v72
    %v948 = vunpack.c.l.b16 %v73
    %v949 = vunpack.c.h.b16 %v73
    %v950 = vunpack.c.l.b16 %v74
    %v951 = vunpack.c.h.b16 %v74
    %v952 = vunpack.c.l.b16 %v75
    %v953 = vunpack.c.h.b16 %v75
    %v954 = vunpack.c.l.b16 %v76
    %v955 = vunpack.c.h.b16 %v76
    %v956 = vunpack.c.l.b16 %v77
    %v957 = vunpack.c.h.b16 %v77
    %v958 = vunpack.c.l.b16 %v78
    %v959 = vunpack.c.h.b16 %v78
    %v960 = vunpack.c.l.b16 %v79
    %v961 = vunpack.c.h.b16 %v79
    %v962 = vunpack.c.l.b16 %v80
    %v963 = vunpack.c.h.b16 %v80
    %v964 = vunpack.c.l.b16 %v81
    %v965 = vunpack.c.h.b16 %v81
    %v966 = vunpack.c.l.b16 %v82
    %v967 = vunpack.c.h.b16 %v82
    %v968 = vunpack.c.l.b16 %v83
    %v969 = vunpack.c.h.b16 %v83
    %v970 = vunpack.c.l.b16 %v84
    %v971 = vunpack.c.h.b16 %v84
    %v972 = vunpack.c.l.b16 %v85
    %v973 = vunpack.c.h.b16 %v85
    %v974 = vunpack.c.l.b16 %v86
    %v975 = vunpack.c.h.b16 %v86
    %v976 = vunpack.c.l.b16 %v87
    %v977 = vunpack.c.h.b16 %v87
    %v978 = vunpack.c.l.b16 %v88
    %v979 = vunpack.c.h.b16 %v88
    %v980 = vunpack.c.l.b16 %v89
    %v981 = vunpack.c.h.b16 %v89
    %v982 = vunpack.c.l.b16 %v90
    %v983 = vunpack.c.h.b16 %v90
    %v984 = vunpack.c.l.b16 %v91
    %v985 = vunpack.c.h.b16 %v91
    %v986 = vunpack.c.l.b16 %v92
    %v987 = vunpack.c.h.b16 %v92
    %v988 = vunpack.c.l.b16 %v93
    %v989 = vunpack.c.h.b16 %v93
    %v990 = vunpack.c.l.b16 %v94
    %v991 = vunpack.c.h.b16 %v94
    %v992 = vunpack.c.l.b16 %v95
    %v993 = vunpack.c.h.b16 %v95
    %v994 = vunpack.c.l.b16 %v96
    %v995 = vunpack.c.h.b16 %v96
    %v996 = vunpack.c.l.b16 %v97
    %v997 = vunpack.c.h.b16 %v97
    %v998 = vunpack.c.l.b16 %v98
    %v999 = vunpack.c.h.b16 %v98
    %v1000 = vunpack.c.l.b16 %v99
    %v1001 = vunpack.c.h.b16 %v99
    %v1002 = vunpack.c.l.b16 %v100
    %v1003 = vunpack.c.h.b16 %v100
    %v1004 = vunpack.c.l.b16 %v101
    %v1005 = vunpack.c.h.b16 %v101
    %v1006 = vunpack.c.l.b16 %v102
    %v1007 = vunpack.c.h.b16 %v102
    %v1008 = vunpack.c.l.b16 %v103
    %v1009 = vunpack.c.h.b16 %v103
    %v1010 = vunpack.c.l.b16 %v104
    %v1011 = vunpack.c.h.b16 %v104
    %v1012 = vunpack.c.l.b16 %v105
    %v1013 = vunpack.c.h.b16 %v105
    %v1014 = vunpack.c.l.b16 %v106
    %v1015 = vunpack.c.h.b16 %v106
    %v1016 = vunpack.c.l.b16 %v107
    %v1017 = vunpack.c.h.b16 %v107
    %v1018 = vunpack.c.l.b16 %v108
    %v1019 = vunpack.c.h.b16 %v108
    %v1020 = vunpack.c.l.b16 %v109
    %v1021 = vunpack.c.h.b16 %v109
    %v1022 = vunpack.c.l.b16 %v110
    %v1023 = vunpack.c.h.b16 %v110
    %v1024 = vunpack.c.l.b16 %v111
    %v1025 = vunpack.c.h.b16 %v111
    %v1026 = vunpack.c.l.b16 %v112
    %v1027 = vunpack.c.h.b16 %v112
    %v1028 = vunpack.c.l.b16 %v113
    %v1029 = vunpack.c.h.b16 %v113
    %v1030 = vunpack.c.l.b16 %v114
    %v1031 = vunpack.c.h.b16 %v114
    %v1032 = vunpack.c.l.b16 %v115
    %v1033 = vunpack.c.h.b16 %v115
    %v1034 = vunpack.c.l.b16 %v116
    %v1035 = vunpack.c.h.b16 %v116
    %v1036 = vunpack.c.l.b16 %v117
    %v1037 = vunpack.c.h.b16 %v117
    %v1038 = vunpack.c.l.b16 %v118
    %v1039 = vunpack.c.h.b16 %v118
    %v1040 = vunpack.c.l.b16 %v119
    %v1041 = vunpack.c.h.b16 %v119
    %v1042 = vunpack.c.l.b16 %v120
    %v1043 = vunpack.c.h.b16 %v120
    %v1044 = vunpack.c.l.b16 %v121
    %v1045 = vunpack.c.h.b16 %v121
    %v1046 = vunpack.c.l.b16 %v122
    %v1047 = vunpack.c.h.b16 %v122
    %v1048 = vunpack.c.l.b16 %v123
    %v1049 = vunpack.c.h.b16 %v123
    %v1050 = vunpack.c.l.b16 %v124
    %v1051 = vunpack.c.h.b16 %v124
    %v1052 = vunpack.c.l.b16 %v125
    %v1053 = vunpack.c.h.b16 %v125
    %v1054 = vunpack.c.l.b16 %v126
    %v1055 = vunpack.c.h.b16 %v126
    %v1056 = vunpack.c.l.b16 %v127
    %v1057 = vunpack.c.h.b16 %v127
    %v1058 = vunpack.c.l.b16 %v128
    %v1059 = vunpack.c.h.b16 %v128
    %v1060 = vunpack.c.l.b16 %v129
    %v1061 = vunpack.c.h.b16 %v129
    %v1062 = vunpack.c.l.b16 %v130
    %v1063 = vunpack.c.h.b16 %v130
    %v1064 = vunpack.c.l.b16 %v131
    %v1065 = vunpack.c.h.b16 %v131
    %v1066 = vunpack.c.l.b16 %v132
    %v1067 = vunpack.c.h.b16 %v132
    %v1068 = vunpack.c.l.b16 %v133
    %v1069 = vunpack.c.h.b16 %v133
    %v1070 = vunpack.c.l.b16 %v134
    %v1071 = vunpack.c.h.b16 %v134
    %v1072 = vunpack.c.l.b16 %v135
    %v1073 = vunpack.c.h.b16 %v135
    %v1074 = vunpack.c.l.b16 %v136
    %v1075 = vunpack.c.h.b16 %v136
    %v1076 = vunpack.c.l.b16 %v137
    %v1077 = vunpack.c.h.b16 %v137
    %v1078 = vunpack.c.l.b16 %v138
    %v1079 = vunpack.c.h.b16 %v138
    %v1080 = vunpack.c.l.b16 %v139
    %v1081 = vunpack.c.h.b16 %v139
    %v1082 = vunpack.c.l.b16 %v140
    %v1083 = vunpack.c.h.b16 %v140
    %v1084 = vunpack.c.l.b16 %v141
    %v1085 = vunpack.c.h.b16 %v141
    %v1086 = vunpack.c.l.b16 %v142
    %v1087 = vunpack.c.h.b16 %v142
    %v1088 = vunpack.c.l.b16 %v143
    %v1089 = vunpack.c.h.b16 %v143
    %v1090 = vunpack.c.l.b16 %v144
    %v1091 = vunpack.c.h.b16 %v144
    %v1092 = vunpack.c.l.b16 %v145
    %v1093 = vunpack.c.h.b16 %v145
    %v1094 = vunpack.c.l.b16 %v146
    %v1095 = vunpack.c.h.b16 %v146
    %v1096 = vunpack.c.l.b16 %v147
    %v1097 = vunpack.c.h.b16 %v147
    %v1098 = vunpack.c.l.b16 %v148
    %v1099 = vunpack.c.h.b16 %v148
    %v1100 = vunpack.c.l.b16 %v149
    %v1101 = vunpack.c.h.b16 %v149
    %v1102 = vunpack.c.l.b16 %v150
    %v1103 = vunpack.c.h.b16 %v150
    %v1104 = vunpack.c.l.b16 %v151
    %v1105 = vunpack.c.h.b16 %v151
    %v1106 = vunpack.c.l.b16 %v152
    %v1107 = vunpack.c.h.b16 %v152
    %v1108 = vunpack.c.l.b16 %v153
    %v1109 = vunpack.c.h.b16 %v153
    %v1110 = vunpack.c.l.b16 %v154
    %v1111 = vunpack.c.h.b16 %v154
    %v1112 = vunpack.c.l.b16 %v155
    %v1113 = vunpack.c.h.b16 %v155
    %v1114 = vunpack.c.l.b16 %v156
    %v1115 = vunpack.c.h.b16 %v156
    %v1116 = vunpack.c.l.b16 %v157
    %v1117 = vunpack.c.h.b16 %v157
    %v1118 = vunpack.c.l.b16 %v158
    %v1119 = vunpack.c.h.b16 %v158
    %v1120 = vunpack.c.l.b16 %v159
    %v1121 = vunpack.c.h.b16 %v159
    %v1122 = vunpack.c.l.b16 %v160
    %v1123 = vunpack.c.h.b16 %v160
    %v1124 = vunpack.c.l.b16 %v161
    %v1125 = vunpack.c.h.b16 %v161
    %v1126 = vunpack.c.l.b16 %v162
    %v1127 = vunpack.c.h.b16 %v162
    %v1128 = vunpack.c.l.b16 %v163
    %v1129 = vunpack.c.h.b16 %v163
    %v1130 = vunpack.c.l.b16 %v164
    %v1131 = vunpack.c.h.b16 %v164
    %v1132 = vunpack.c.l.b16 %v165
    %v1133 = vunpack.c.h.b16 %v165
    %v1134 = vunpack.c.l.b16 %v166
    %v1135 = vunpack.c.h.b16 %v166
    %v1136 = vunpack.c.l.b16 %v167
    %v1137 = vunpack.c.h.b16 %v167
    %v1138 = vunpack.c.l.b16 %v168
    %v1139 = vunpack.c.h.b16 %v168
    %v1140 = vunpack.c.l.b16 %v169
    %v1141 = vunpack.c.h.b16 %v169
    %v1142 = vunpack.c.l.b16 %v170
    %v1143 = vunpack.c.h.b16 %v170
    %v1144 = vunpack.c.l.b16 %v171
    %v1145 = vunpack.c.h.b16 %v171
    %v1146 = vunpack.c.l.b16 %v172
    %v1147 = vunpack.c.h.b16 %v172
    %v1148 = vunpack.c.l.b16 %v173
    %v1149 = vunpack.c.h.b16 %v173
    %v1150 = vunpack.c.l.b16 %v174
    %v1151 = vunpack.c.h.b16 %v174
    %v1152 = vunpack.c.l.b16 %v175
    %v1153 = vunpack.c.h.b16 %v175
    %v1154 = vunpack.c.l.b16 %v176
    %v1155 = vunpack.c.h.b16 %v176
    %v1156 = vunpack.c.l.b16 %v177
    %v1157 = vunpack.c.h.b16 %v177
    %v1158 = vunpack.c.l.b16 %v178
    %v1159 = vunpack.c.h.b16 %v178
    %v1160 = vunpack.c.l.b16 %v179
    %v1161 = vunpack.c.h.b16 %v179
    %v1162 = vunpack.c.l.b16 %v180
    %v1163 = vunpack.c.h.b16 %v180
    %v1164 = vunpack.c.l.b16 %v181
    %v1165 = vunpack.c.h.b16 %v181
    %v1166 = vunpack.c.l.b16 %v182
    %v1167 = vunpack.c.h.b16 %v182
    %v1168 = vunpack.c.l.b16 %v183
    %v1169 = vunpack.c.h.b16 %v183
    %v1170 = vunpack.c.l.b16 %v184
    %v1171 = vunpack.c.h.b16 %v184
    %v1172 = vunpack.c.l.b16 %v185
    %v1173 = vunpack.c.h.b16 %v185
    %v1174 = vunpack.c.l.b16 %v186
    %v1175 = vunpack.c.h.b16 %v186
    %v1176 = vunpack.c.l.b16 %v187
    %v1177 = vunpack.c.h.b16 %v187
    %v1178 = vunpack.c.l.b16 %v188
    %v1179 = vunpack.c.h.b16 %v188
    %v1180 = vunpack.c.l.b16 %v189
    %v1181 = vunpack.c.h.b16 %v189
    %v1182 = vunpack.c.l.b16 %v190
    %v1183 = vunpack.c.h.b16 %v190
    %v1184 = vunpack.c.l.b16 %v191
    %v1185 = vunpack.c.h.b16 %v191
    %v1186 = vunpack.c.l.b16 %v192
    %v1187 = vunpack.c.h.b16 %v192
    %v1188 = vunpack.c.l.b16 %v193
    %v1189 = vunpack.c.h.b16 %v193
    %v1190 = vunpack.c.l.b16 %v194
    %v1191 = vunpack.c.h.b16 %v194
    %v1192 = vunpack.c.l.b16 %v195
    %v1193 = vunpack.c.h.b16 %v195
    %v1194 = vunpack.c.l.b16 %v196
    %v1195 = vunpack.c.h.b16 %v196
    %v1196 = vunpack.c.l.b16 %v197
    %v1197 = vunpack.c.h.b16 %v197
    %v1198 = vunpack.c.l.b16 %v198
    %v1199 = vunpack.c.h.b16 %v198
    %v1200 = vunpack.c.l.b16 %v199
    %v1201 = vunpack.c.h.b16 %v199
    %v1202 = vunpack.c.l.b16 %v200
    %v1203 = vunpack.c.h.b16 %v200
    %v1204 = vunpack.c.l.b16 %v201
    %v1205 = vunpack.c.h.b16 %v201
    %v1206 = vunpack.c.l.b16 %v202
    %v1207 = vunpack.c.h.b16 %v202
    %v1208 = vunpack.c.l.b16 %v203
    %v1209 = vunpack.c.h.b16 %v203
    %v1210 = vunpack.c.l.b16 %v204
    %v1211 = vunpack.c.h.b16 %v204
    %v1212 = vunpack.c.l.b16 %v205
    %v1213 = vunpack.c.h.b16 %v205
    %v1214 = vunpack.c.l.b16 %v206
    %v1215 = vunpack.c.h.b16 %v206
    %v1216 = vunpack.c.l.b16 %v207
    %v1217 = vunpack.c.h.b16 %v207
    %v1218 = vunpack.c.l.b16 %v208
    %v1219 = vunpack.c.h.b16 %v208
    %v1220 = vunpack.c.l.b16 %v209
    %v1221 = vunpack.c.h.b16 %v209
    %v1222 = vunpack.c.l.b16 %v210
    %v1223 = vunpack.c.h.b16 %v210
    %v1224 = vunpack.c.l.b16 %v211
    %v1225 = vunpack.c.h.b16 %v211
    %v1226 = vunpack.c.l.b16 %v212
    %v1227 = vunpack.c.h.b16 %v212
    %v1228 = vunpack.c.l.b16 %v213
    %v1229 = vunpack.c.h.b16 %v213
    %v1230 = vunpack.c.l.b16 %v214
    %v1231 = vunpack.c.h.b16 %v214
    %v1232 = vunpack.c.l.b16 %v215
    %v1233 = vunpack.c.h.b16 %v215
    %v1234 = vunpack.c.l.b16 %v216
    %v1235 = vunpack.c.h.b16 %v216
    %v1236 = vunpack.c.l.b16 %v217
    %v1237 = vunpack.c.h.b16 %v217
    %v1238 = vunpack.c.l.b16 %v218
    %v1239 = vunpack.c.h.b16 %v218
    %v1240 = vunpack.c.l.b16 %v219
    %v1241 = vunpack.c.h.b16 %v219
    %v1242 = vunpack.c.l.b16 %v220
    %v1243 = vunpack.c.h.b16 %v220
    %v1244 = vunpack.c.l.b16 %v221
    %v1245 = vunpack.c.h.b16 %v221
    %v1246 = vunpack.c.l.b16 %v222
    %v1247 = vunpack.c.h.b16 %v222
    %v1248 = vunpack.c.l.b16 %v223
    %v1249 = vunpack.c.h.b16 %v223
    %v1250 = vunpack.c.l.b16 %v224
    %v1251 = vunpack.c.h.b16 %v224
    %v1252 = vunpack.c.l.b16 %v225
    %v1253 = vunpack.c.h.b16 %v225
    %v1254 = vunpack.c.l.b16 %v226
    %v1255 = vunpack.c.h.b16 %v226
    %v1256 = vunpack.c.l.b16 %v227
    %v1257 = vunpack.c.h.b16 %v227
    %v1258 = vunpack.c.l.b16 %v228
    %v1259 = vunpack.c.h.b16 %v228
    %v1260 = vunpack.c.l.b16 %v229
    %v1261 = vunpack.c.h.b16 %v229
    %v1262 = vunpack.c.l.b16 %v230
    %v1263 = vunpack.c.h.b16 %v230
    %v1264 = vunpack.c.l.b16 %v231
    %v1265 = vunpack.c.h.b16 %v231
    %v1266 = vunpack.c.l.b16 %v232
    %v1267 = vunpack.c.h.b16 %v232
    %v1268 = vunpack.c.l.b16 %v233
    %v1269 = vunpack.c.h.b16 %v233
    %v1270 = vunpack.c.l.b16 %v234
    %v1271 = vunpack.c.h.b16 %v234
    %v1272 = vunpack.c.l.b16 %v235
    %v1273 = vunpack.c.h.b16 %v235
    %v1274 = vunpack.c.l.b16 %v236
    %v1275 = vunpack.c.h.b16 %v236
    %v1276 = vunpack.c.l.b16 %v237
    %v1277 = vunpack.c.h.b16 %v237
    %v1278 = vunpack.c.l.b16 %v238
    %v1279 = vunpack.c.h.b16 %v238
    %v1280 = vunpack.c.l.b16 %v239
    %v1281 = vunpack.c.h.b16 %v239
    %v1282 = vunpack.c.l.b16 %v240
    %v1283 = vunpack.c.h.b16 %v240
    %v1284 = vunpack.c.l.b16 %v241
    %v1285 = vunpack.c.h.b16 %v241
    %v1286 = vunpack.c.l.b16 %v242
    %v1287 = vunpack.c.h.b16 %v242
    %v1288 = vunpack.c.l.b16 %v243
    %v1289 = vunpack.c.h.b16 %v243
    %v1290 = vunpack.c.l.b16 %v244
    %v1291 = vunpack.c.h.b16 %v244
    %v1292 = vunpack.c.l.b16 %v245
    %v1293 = vunpack.c.h.b16 %v245
    %v1294 = vunpack.c.l.b16 %v246
    %v1295 = vunpack.c.h.b16 %v246
    %v1296 = vunpack.c.l.b16 %v247
    %v1297 = vunpack.c.h.b16 %v247
    %v1298 = vunpack.c.l.b16 %v248
    %v1299 = vunpack.c.h.b16 %v248
    %v1300 = vunpack.c.l.b16 %v249
    %v1301 = vunpack.c.h.b16 %v249
    %v1302 = vunpack.c.l.b16 %v250
    %v1303 = vunpack.c.h.b16 %v250
    %v1304 = vunpack.c.l.b16 %v251
    %v1305 = vunpack.c.h.b16 %v251
    %v1306 = vunpack.c.l.b16 %v252
    %v1307 = vunpack.c.h.b16 %v252
    %v1308 = vunpack.c.l.b16 %v253
    %v1309 = vunpack.c.h.b16 %v253
    %v1310 = vunpack.c.l.b16 %v254
    %v1311 = vunpack.c.h.b16 %v254
    %v1312 = vunpack.c.l.b16 %v255
    %v1313 = vunpack.c.h.b16 %v255
    %v1314 = vunpack.c.l.b16 %v256
    %v1315 = vunpack.c.h.b16 %v256
    %v1316 = vunpack.c.l.b16 %v257
    %v1317 = vunpack.c.h.b16 %v257
    %v1318 = vunpack.c.l.b16 %v258
    %v1319 = vunpack.c.h.b16 %v258
    %v1320 = vunpack.c.l.b16 %v259
    %v1321 = vunpack.c.h.b16 %v259
    %v1322 = vunpack.c.l.b16 %v260
    %v1323 = vunpack.c.h.b16 %v260
    %v1324 = vunpack.c.l.b16 %v261
    %v1325 = vunpack.c.h.b16 %v261
    %v1326 = vunpack.c.l.b16 %v262
    %v1327 = vunpack.c.h.b16 %v262
    %v1328 = vunpack.c.l.b16 %v263
    %v1329 = vunpack.c.h.b16 %v263
    %v1330 = vunpack.c.l.b16 %v264
    %v1331 = vunpack.c.h.b16 %v264
    %v1332 = vunpack.c.l.b16 %v265
    %v1333 = vunpack.c.h.b16 %v265
    %v1334 = vunpack.c.l.b16 %v266
    %v1335 = vunpack.c.h.b16 %v266
    %v1336 = vunpack.c.l.b16 %v267
    %v1337 = vunpack.c.h.b16 %v267
    %v1338 = vunpack.c.l.b16 %v268
    %v1339 = vunpack.c.h.b16 %v268
    %v1340 = vunpack.c.l.b16 %v269
    %v1341 = vunpack.c.h.b16 %v269
    %v1342 = vunpack.c.l.b16 %v270
    %v1343 = vunpack.c.h.b16 %v270
    %v1344 = vunpack.c.l.b16 %v271
    %v1345 = vunpack.c.h.b16 %v271
    %v1346 = vunpack.c.l.b16 %v272
    %v1347 = vunpack.c.h.b16 %v272
    %v1348 = vunpack.c.l.b16 %v273
    %v1349 = vunpack.c.h.b16 %v273
    %v1350 = vunpack.c.l.b16 %v274
    %v1351 = vunpack.c.h.b16 %v274
    %v1352 = vunpack.c.l.b16 %v275
    %v1353 = vunpack.c.h.b16 %v275
    %v1354 = vunpack.c.l.b16 %v276
    %v1355 = vunpack.c.h.b16 %v276
    %v1356 = vunpack.c.l.b16 %v277
    %v1357 = vunpack.c.h.b16 %v277
    %v1358 = vunpack.c.l.b16 %v278
    %v1359 = vunpack.c.h.b16 %v278
    %v1360 = vunpack.c.l.b16 %v279
    %v1361 = vunpack.c.h.b16 %v279
    %v1362 = vunpack.c.l.b16 %v280
    %v1363 = vunpack.c.h.b16 %v280
    %v1364 = vunpack.c.l.b16 %v281
    %v1365 = vunpack.c.h.b16 %v281
    %v1366 = vunpack.c.l.b16 %v282
    %v1367 = vunpack.c.h.b16 %v282
    %v1368 = vunpack.c.l.b16 %v283
    %v1369 = vunpack.c.h.b16 %v283
    %v1370 = vunpack.c.l.b16 %v284
    %v1371 = vunpack.c.h.b16 %v284
    %v1372 = vunpack.c.l.b16 %v285
    %v1373 = vunpack.c.h.b16 %v285
    %v1374 = vunpack.c.l.b16 %v286
    %v1375 = vunpack.c.h.b16 %v286
    %v1376 = vunpack.c.l.b16 %v287
    %v1377 = vunpack.c.h.b16 %v287
    %v1378 = vunpack.c.l.b16 %v288
    %v1379 = vunpack.c.h.b16 %v288
    %v1380 = vunpack.c.l.b16 %v289
    %v1381 = vunpack.c.h.b16 %v289
    %v1382 = vunpack.c.l.b16 %v290
    %v1383 = vunpack.c.h.b16 %v290
    %v1384 = vunpack.c.l.b16 %v291
    %v1385 = vunpack.c.h.b16 %v291
    %v1386 = vunpack.c.l.b16 %v292
    %v1387 = vunpack.c.h.b16 %v292
    %v1388 = vunpack.c.l.b16 %v293
    %v1389 = vunpack.c.h.b16 %v293
    %v1390 = vunpack.c.l.b16 %v294
    %v1391 = vunpack.c.h.b16 %v294
    %v1392 = vunpack.c.l.b16 %v295
    %v1393 = vunpack.c.h.b16 %v295
    %v1394 = vunpack.c.l.b16 %v296
    %v1395 = vunpack.c.h.b16 %v296
    %v1396 = vunpack.c.l.b16 %v297
    %v1397 = vunpack.c.h.b16 %v297
    %v1398 = vunpack.c.l.b16 %v298
    %v1399 = vunpack.c.h.b16 %v298
    %v1400 = vunpack.c.l.b16 %v299
    %v1401 = vunpack.c.h.b16 %v299
    %v1402 = vunpack.c.l.b16 %v300
    %v1403 = vunpack.c.h.b16 %v300
    %v1404 = vunpack.c.l.b16 %v301
    %v1405 = vunpack.c.h.b16 %v301
    %v1406 = vunpack.c.l.b16 %v302
    %v1407 = vunpack.c.h.b16 %v302
    %v1408 = vunpack.c.l.b16 %v303
    %v1409 = vunpack.c.h.b16 %v303
    %v1410 = vunpack.c.l.b16 %v304
    %v1411 = vunpack.c.h.b16 %v304
    %v1412 = vunpack.c.l.b16 %v305
    %v1413 = vunpack.c.h.b16 %v305
    %v1414 = vunpack.c.l.b16 %v306
    %v1415 = vunpack.c.h.b16 %v306
    %v1416 = vunpack.c.l.b16 %v307
    %v1417 = vunpack.c.h.b16 %v307
    %v1418 = vunpack.c.l.b16 %v308
    %v1419 = vunpack.c.h.b16 %v308
    %v1420 = vunpack.c.l.b16 %v309
    %v1421 = vunpack.c.h.b16 %v309
    %v1422 = vunpack.c.l.b16 %v310
    %v1423 = vunpack.c.h.b16 %v310
    %v1424 = vunpack.c.l.b16 %v311
    %v1425 = vunpack.c.h.b16 %v311
    %v1426 = vunpack.c.l.b16 %v312
    %v1427 = vunpack.c.h.b16 %v312
    %v1428 = vunpack.c.l.b16 %v313
    %v1429 = vunpack.c.h.b16 %v313
    %v1430 = vunpack.c.l.b16 %v314
    %v1431 = vunpack.c.h.b16 %v314
    %v1432 = vunpack.c.l.b16 %v315
    %v1433 = vunpack.c.h.b16 %v315
    %v1434 = vunpack.c.l.b16 %v316
    %v1435 = vunpack.c.h.b16 %v316
    %v1436 = vunpack.c.l.b16 %v317
    %v1437 = vunpack.c.h.b16 %v317
    %v1438 = vunpack.c.l.b16 %v318
    %v1439 = vunpack.c.h.b16 %v318
    %v1440 = vunpack.c.l.b16 %v319
    %v1441 = vunpack.c.h.b16 %v319
    %v1442 = vunpack.c.l.b16 %v320
    %v1443 = vunpack.c.h.b16 %v320
    %v1444 = vunpack.c.l.b16 %v321
    %v1445 = vunpack.c.h.b16 %v321
    %v1446 = vunpack.c.l.b16 %v322
    %v1447 = vunpack.c.h.b16 %v322
    %v1448 = vunpack.c.l.b16 %v323
    %v1449 = vunpack.c.h.b16 %v323
    %v1450 = vunpack.c.l.b16 %v324
    %v1451 = vunpack.c.h.b16 %v324
    %v1452 = vunpack.c.l.b16 %v325
    %v1453 = vunpack.c.h.b16 %v325
    %v1454 = vunpack.c.l.b16 %v326
    %v1455 = vunpack.c.h.b16 %v326
    %v1456 = vunpack.c.l.b16 %v327
    %v1457 = vunpack.c.h.b16 %v327
    %v1458 = vunpack.c.l.b16 %v328
    %v1459 = vunpack.c.h.b16 %v328
    %v1460 = vunpack.c.l.b16 %v329
    %v1461 = vunpack.c.h.b16 %v329
    %v1462 = vunpack.c.l.b16 %v330
    %v1463 = vunpack.c.h.b16 %v330
    %v1464 = vunpack.c.l.b16 %v331
    %v1465 = vunpack.c.h.b16 %v331
    %v1466 = vunpack.c.l.b16 %v332
    %v1467 = vunpack.c.h.b16 %v332
    %v1468 = vunpack.c.l.b16 %v333
    %v1469 = vunpack.c.h.b16 %v333
    %v1470 = vunpack.c.l.b16 %v334
    %v1471 = vunpack.c.h.b16 %v334
    %v1472 = vunpack.c.l.b16 %v335
    %v1473 = vunpack.c.h.b16 %v335
    %v1474 = vunpack.c.l.b16 %v336
    %v1475 = vunpack.c.h.b16 %v336
    %v1476 = vunpack.c.l.b16 %v337
    %v1477 = vunpack.c.h.b16 %v337
    %v1478 = vunpack.c.l.b16 %v338
    %v1479 = vunpack.c.h.b16 %v338
    %v1480 = vunpack.c.l.b16 %v339
    %v1481 = vunpack.c.h.b16 %v339
    %v1482 = vunpack.c.l.b16 %v340
    %v1483 = vunpack.c.h.b16 %v340
    %v1484 = vunpack.c.l.b16 %v341
    %v1485 = vunpack.c.h.b16 %v341
    %v1486 = vunpack.c.l.b16 %v342
    %v1487 = vunpack.c.h.b16 %v342
    %v1488 = vunpack.c.l.b16 %v343
    %v1489 = vunpack.c.h.b16 %v343
    %v1490 = vunpack.c.l.b16 %v344
    %v1491 = vunpack.c.h.b16 %v344
    %v1492 = vunpack.c.l.b16 %v345
    %v1493 = vunpack.c.h.b16 %v345
    %v1494 = vunpack.c.l.b16 %v346
    %v1495 = vunpack.c.h.b16 %v346
    %v1496 = vunpack.c.l.b16 %v347
    %v1497 = vunpack.c.h.b16 %v347
    %v1498 = vunpack.c.l.b16 %v348
    %v1499 = vunpack.c.h.b16 %v348
    %v1500 = vunpack.c.l.b16 %v349
    %v1501 = vunpack.c.h.b16 %v349
    %v1502 = vunpack.c.l.b16 %v350
    %v1503 = vunpack.c.h.b16 %v350
    %v1504 = vunpack.c.l.b16 %v351
    %v1505 = vunpack.c.h.b16 %v351
    %v1506 = vunpack.c.l.b16 %v352
    %v1507 = vunpack.c.h.b16 %v352
    %v1508 = vunpack.c.l.b16 %v353
    %v1509 = vunpack.c.h.b16 %v353
    %v1510 = vunpack.c.l.b16 %v354
    %v1511 = vunpack.c.h.b16 %v354
    %v1512 = vunpack.c.l.b16 %v355
    %v1513 = vunpack.c.h.b16 %v355
    %v1514 = vunpack.c.l.b16 %v356
    %v1515 = vunpack.c.h.b16 %v356
    %v1516 = vunpack.c.l.b16 %v357
    %v1517 = vunpack.c.h.b16 %v357
    %v1518 = vunpack.c.l.b16 %v358
    %v1519 = vunpack.c.h.b16 %v358
    %v1520 = vunpack.c.l.b16 %v359
    %v1521 = vunpack.c.h.b16 %v359
    %v1522 = vunpack.c.l.b16 %v360
    %v1523 = vunpack.c.h.b16 %v360
    %v1524 = vunpack.c.l.b16 %v361
    %v1525 = vunpack.c.h.b16 %v361
    %v1526 = vunpack.c.l.b16 %v362
    %v1527 = vunpack.c.h.b16 %v362
    %v1528 = vunpack.c.l.b16 %v363
    %v1529 = vunpack.c.h.b16 %v363
    %v1530 = vunpack.c.l.b16 %v364
    %v1531 = vunpack.c.h.b16 %v364
    %v1532 = vunpack.c.l.b16 %v365
    %v1533 = vunpack.c.h.b16 %v365
    %v1534 = vunpack.c.l.b16 %v366
    %v1535 = vunpack.c.h.b16 %v366
    %v1536 = vunpack.c.l.b16 %v367
    %v1537 = vunpack.c.h.b16 %v367
    %v1538 = vunpack.c.l.b16 %v368
    %v1539 = vunpack.c.h.b16 %v368
    %v1540 = vunpack.c.l.b16 %v369
    %v1541 = vunpack.c.h.b16 %v369
    %v1542 = vunpack.c.l.b16 %v370
    %v1543 = vunpack.c.h.b16 %v370
    %v1544 = vunpack.c.l.b16 %v371
    %v1545 = vunpack.c.h.b16 %v371
    %v1546 = vunpack.c.l.b16 %v372
    %v1547 = vunpack.c.h.b16 %v372
    %v1548 = vunpack.c.l.b16 %v373
    %v1549 = vunpack.c.h.b16 %v373
    %v1550 = vunpack.c.l.b16 %v374
    %v1551 = vunpack.c.h.b16 %v374
    %v1552 = vunpack.c.l.b16 %v375
    %v1553 = vunpack.c.h.b16 %v375
    %v1554 = vunpack.c.l.b16 %v376
    %v1555 = vunpack.c.h.b16 %v376
    %v1556 = vunpack.c.l.b16 %v377
    %v1557 = vunpack.c.h.b16 %v377
    %v1558 = vunpack.c.l.b16 %v378
    %v1559 = vunpack.c.h.b16 %v378
    %v1560 = vunpack.c.l.b16 %v379
    %v1561 = vunpack.c.h.b16 %v379
    %v1562 = vunpack.c.l.b16 %v380
    %v1563 = vunpack.c.h.b16 %v380
    %v1564 = vunpack.c.l.b16 %v381
    %v1565 = vunpack.c.h.b16 %v381
    %v1566 = vunpack.c.l.b16 %v382
    %v1567 = vunpack.c.h.b16 %v382
    %v1568 = vunpack.c.l.b16 %v383
    %v1569 = vunpack.c.h.b16 %v383
    %v1570 = vunpack.c.l.b16 %v384
    %v1571 = vunpack.c.h.b16 %v384
    %v1572 = vunpack.c.l.b16 %v385
    %v1573 = vunpack.c.h.b16 %v385
    %v1574 = vunpack.c.l.b16 %v386
    %v1575 = vunpack.c.h.b16 %v386
    %v1576 = vunpack.c.l.b16 %v387
    %v1577 = vunpack.c.h.b16 %v387
    %v1578 = vunpack.c.l.b16 %v388
    %v1579 = vunpack.c.h.b16 %v388
    %v1580 = vunpack.c.l.b16 %v389
    %v1581 = vunpack.c.h.b16 %v389
    %v1582 = vunpack.c.l.b16 %v390
    %v1583 = vunpack.c.h.b16 %v390
    %v1584 = vunpack.c.l.b16 %v391
    %v1585 = vunpack.c.h.b16 %v391
    %v1586 = vunpack.c.l.b16 %v392
    %v1587 = vunpack.c.h.b16 %v392
    %v1588 = vunpack.c.l.b16 %v393
    %v1589 = vunpack.c.h.b16 %v393
    %v1590 = vunpack.c.l.b16 %v394
    %v1591 = vunpack.c.h.b16 %v394
    %v1592 = vunpack.c.l.b16 %v395
    %v1593 = vunpack.c.h.b16 %v395
    %v1594 = vunpack.c.l.b16 %v396
    %v1595 = vunpack.c.h.b16 %v396
    %v1596 = vunpack.c.l.b16 %v397
    %v1597 = vunpack.c.h.b16 %v397
    %v1598 = vunpack.c.l.b16 %v398
    %v1599 = vunpack.c.h.b16 %v398
    %v1600 = vunpack.c.l.b16 %v399
    %v1601 = vunpack.c.h.b16 %v399
    %v1602 = vunpack.c.l.b16 %v400
    %v1603 = vunpack.c.h.b16 %v400
    %v1604 = vunpack.c.l.b16 %v401
    %v1605 = vunpack.c.h.b16 %v401
    %v1606 = vunpack.c.l.b16 %v402
    %v1607 = vunpack.c.h.b16 %v402
    %v1608 = vunpack.c.l.b16 %v403
    %v1609 = vunpack.c.h.b16 %v403
    %v1610 = vunpack.c.l.b16 %v404
    %v1611 = vunpack.c.h.b16 %v404
    %v1612 = vunpack.c.l.b16 %v405
    %v1613 = vunpack.c.h.b16 %v405
    %v1614 = vunpack.c.l.b16 %v406
    %v1615 = vunpack.c.h.b16 %v406
    %v1616 = vunpack.c.l.b16 %v407
    %v1617 = vunpack.c.h.b16 %v407
    %v1618 = vunpack.c.l.b16 %v408
    %v1619 = vunpack.c.h.b16 %v408
    %v1620 = vunpack.c.l.b16 %v409
    %v1621 = vunpack.c.h.b16 %v409
    %v1622 = vunpack.c.l.b16 %v410
    %v1623 = vunpack.c.h.b16 %v410
    %v1624 = vunpack.c.l.b16 %v411
    %v1625 = vunpack.c.h.b16 %v411
    %v1626 = vunpack.c.l.b16 %v412
    %v1627 = vunpack.c.h.b16 %v412
    %v1628 = vunpack.c.l.b16 %v413
    %v1629 = vunpack.c.h.b16 %v413
    %v1630 = vunpack.c.l.b16 %v414
    %v1631 = vunpack.c.h.b16 %v414
    %v1632 = vunpack.c.l.b16 %v415
    %v1633 = vunpack.c.h.b16 %v415
    %v1634 = vunpack.c.l.b16 %v416
    %v1635 = vunpack.c.h.b16 %v416
    %v1636 = vunpack.c.l.b16 %v417
    %v1637 = vunpack.c.h.b16 %v417
    %v1638 = vunpack.c.l.b16 %v418
    %v1639 = vunpack.c.h.b16 %v418
    %v1640 = vunpack.c.l.b16 %v419
    %v1641 = vunpack.c.h.b16 %v419
    %v1642 = vunpack.c.l.b16 %v420
    %v1643 = vunpack.c.h.b16 %v420
    %v1644 = vunpack.c.l.b16 %v421
    %v1645 = vunpack.c.h.b16 %v421
    %v1646 = vunpack.c.l.b16 %v422
    %v1647 = vunpack.c.h.b16 %v422
    %v1648 = vunpack.c.l.b16 %v423
    %v1649 = vunpack.c.h.b16 %v423
    %v1650 = vunpack.c.l.b16 %v424
    %v1651 = vunpack.c.h.b16 %v424
    %v1652 = vunpack.c.l.b16 %v425
    %v1653 = vunpack.c.h.b16 %v425
    %v1654 = vunpack.c.l.b16 %v426
    %v1655 = vunpack.c.h.b16 %v426
    %v1656 = vunpack.c.l.b16 %v427
    %v1657 = vunpack.c.h.b16 %v427
    %v1658 = vunpack.c.l.b16 %v428
    %v1659 = vunpack.c.h.b16 %v428
    %v1660 = vunpack.c.l.b16 %v429
    %v1661 = vunpack.c.h.b16 %v429
    %v1662 = vunpack.c.l.b16 %v430
    %v1663 = vunpack.c.h.b16 %v430
    %v1664 = vunpack.c.l.b16 %v431
    %v1665 = vunpack.c.h.b16 %v431
    %v1666 = vunpack.c.l.b16 %v432
    %v1667 = vunpack.c.h.b16 %v432
    %v1668 = vunpack.c.l.b16 %v433
    %v1669 = vunpack.c.h.b16 %v433
    %v1670 = vunpack.c.l.b16 %v434
    %v1671 = vunpack.c.h.b16 %v434
    %v1672 = vunpack.c.l.b16 %v435
    %v1673 = vunpack.c.h.b16 %v435
    %v1674 = vunpack.c.l.b16 %v436
    %v1675 = vunpack.c.h.b16 %v436
    %v1676 = vunpack.c.l.b16 %v437
    %v1677 = vunpack.c.h.b16 %v437
    %v1678 = vunpack.c.l.b16 %v438
    %v1679 = vunpack.c.h.b16 %v438
    %v1680 = vunpack.c.l.b16 %v439
    %v1681 = vunpack.c.h.b16 %v439
    %v1682 = vpack.c.b16 %v916, %v914
    %v1683 = vpack.c.b16 %v917, %v915
    %v1684 = vpack.c.b16 %v920, %v918
    %v1685 = vpack.c.b16 %v921, %v919
    %v1686 = vpack.c.b16 %v924, %v922
    %v1687 = vpack.c.b16 %v925, %v923
    %v1688 = vpack.c.b16 %v928, %v926
    %v1689 = vpack.c.b16 %v929, %v927
    %v1690 = vpack.c.b16 %v932, %v930
    %v1691 = vpack.c.b16 %v933, %v931
    %v1692 = vpack.c.b16 %v936, %v934
    %v1693 = vpack.c.b16 %v937, %v935
    %v1694 = vpack.c.b16 %v940, %v938
    %v1695 = vpack.c.b16 %v941, %v939
    %v1696 = vpack.c.b16 %v944, %v942
    %v1697 = vpack.c.b16 %v945, %v943
    %v1698 = vpack.c.b16 %v948, %v946
    %v1699 = vpack.c.b16 %v949, %v947
    %v1700 = vpack.c.b16 %v952, %v950
    %v1701 = vpack.c.b16 %v953, %v951
    %v1702 = vpack.c.b16 %v956, %v954
    %v1703 = vpack.c.b16 %v957, %v955
    %v1704 = vpack.c.b16 %v960, %v958
    %v1705 = vpack.c.b16 %v961, %v959
    %v1706 = vpack.c.b16 %v964, %v962
    %v1707 = vpack.c.b16 %v965, %v963
    %v1708 = vpack.c.b16 %v968, %v966
    %v1709 = vpack.c.b16 %v969, %v967
    %v1710 = vpack.c.b16 %v972, %v970
    %v1711 = vpack.c.b16 %v973, %v971
    %v1712 = vpack.c.b16 %v976, %v974
    %v1713 = vpack.c.b16 %v977, %v975
    %v1714 = vpack.c.b16 %v980, %v978
    %v1715 = vpack.c.b16 %v981, %v979
    %v1716 = vpack.c.b16 %v984, %v982
    %v1717 = vpack.c.b16 %v985, %v983
    %v1718 = vpack.c.b16 %v988, %v986
    %v1719 = vpack.c.b16 %v989, %v987
    %v1720 = vpack.c.b16 %v992, %v990
    %v1721 = vpack.c.b16 %v993, %v991
    %v1722 = vpack.c.b16 %v996, %v994
    %v1723 = vpack.c.b16 %v997, %v995
    %v1724 = vpack.c.b16 %v1000, %v998
    %v1725 = vpack.c.b16 %v1001, %v999
    %v1726 = vpack.c.b16 %v1004, %v1002
    %v1727 = vpack.c.b16 %v1005, %v1003
    %v1728 = vpack.c.b16 %v1008, %v1006
    %v1729 = vpack.c.b16 %v1009, %v1007
    %v1730 = vpack.c.b16 %v1012, %v1010
    %v1731 = vpack.c.b16 %v1013, %v1011
    %v1732 = vpack.c.b16 %v1016, %v1014
    %v1733 = vpack.c.b16 %v1017, %v1015
    %v1734 = vpack.c.b16 %v1020, %v1018
    %v1735 = vpack.c.b16 %v1021, %v1019
    %v1736 = vpack.c.b16 %v1024, %v1022
    %v1737 = vpack.c.b16 %v1025, %v1023
    %v1738 = vpack.c.b16 %v1028, %v1026
    %v1739 = vpack.c.b16 %v1029, %v1027
    %v1740 = vpack.c.b16 %v1032, %v1030
    %v1741 = vpack.c.b16 %v1033, %v1031
    %v1742 = vpack.c.b16 %v1036, %v1034
    %v1743 = vpack.c.b16 %v1037, %v1035
    %v1744 = vpack.c.b16 %v1040, %v1038
    %v1745 = vpack.c.b16 %v1041, %v1039
    %v1746 = vpack.c.b16 %v1044, %v1042
    %v1747 = vpack.c.b16 %v1045, %v1043
    %v1748 = vpack.c.b16 %v1048, %v1046
    %v1749 = vpack.c.b16 %v1049, %v1047
    %v1750 = vpack.c.b16 %v1052, %v1050
    %v1751 = vpack.c.b16 %v1053, %v1051
    %v1752 = vpack.c.b16 %v1056, %v1054
    %v1753 = vpack.c.b16 %v1057, %v1055
    %v1754 = vpack.c.b16 %v1060, %v1058
    %v1755 = vpack.c.b16 %v1061, %v1059
    %v1756 = vpack.c.b16 %v1064, %v1062
    %v1757 = vpack.c.b16 %v1065, %v1063
    %v1758 = vpack.c.b16 %v1068, %v1066
    %v1759 = vpack.c.b16 %v1069, %v1067
    %v1760 = vpack.c.b16 %v1072, %v1070
    %v1761 = vpack.c.b16 %v1073, %v1071
    %v1762 = vpack.c.b16 %v1076, %v1074
    %v1763 = vpack.c.b16 %v1077, %v1075
    %v1764 = vpack.c.b16 %v1080, %v1078
    %v1765 = vpack.c.b16 %v1081, %v1079
    %v1766 = vpack.c.b16 %v1084, %v1082
    %v1767 = vpack.c.b16 %v1085, %v1083
    %v1768 = vpack.c.b16 %v1088, %v1086
    %v1769 = vpack.c.b16 %v1089, %v1087
    %v1770 = vpack.c.b16 %v1092, %v1090
    %v1771 = vpack.c.b16 %v1093, %v1091
    %v1772 = vpack.c.b16 %v1096, %v1094
    %v1773 = vpack.c.b16 %v1097, %v1095
    %v1774 = vpack.c.b16 %v1100, %v1098
    %v1775 = vpack.c.b16 %v1101, %v1099
    %v1776 = vpack.c.b16 %v1104, %v1102
    %v1777 = vpack.c.b16 %v1105, %v1103
    %v1778 = vpack.c.b16 %v1108, %v1106
    %v1779 = vpack.c.b16 %v1109, %v1107
    %v1780 = vpack.c.b16 %v1112, %v1110
    %v1781 = vpack.c.b16 %v1113, %v1111
    %v1782 = vpack.c.b16 %v1116, %v1114
    %v1783 = vpack.c.b16 %v1117, %v1115
    %v1784 = vpack.c.b16 %v1120, %v1118
    %v1785 = vpack.c.b16 %v1121, %v1119
    %v1786 = vpack.c.b16 %v1124, %v1122
    %v1787 = vpack.c.b16 %v1125, %v1123
    %v1788 = vpack.c.b16 %v1128, %v1126
    %v1789 = vpack.c.b16 %v1129, %v1127
    %v1790 = vpack.c.b16 %v1132, %v1130
    %v1791 = vpack.c.b16 %v1133, %v1131
    %v1792 = vpack.c.b16 %v1136, %v1134
    %v1793 = vpack.c.b16 %v1137, %v1135
    %v1794 = vpack.c.b16 %v1140, %v1138
    %v1795 = vpack.c.b16 %v1141, %v1139
    %v1796 = vpack.c.b16 %v1144, %v1142
    %v1797 = vpack.c.b16 %v1145, %v1143
    %v1798 = vpack.c.b16 %v1148, %v1146
    %v1799 = vpack.c.b16 %v1149, %v1147
    %v1800 = vpack.c.b16 %v1152, %v1150
    %v1801 = vpack.c.b16 %v1153, %v1151
    %v1802 = vpack.c.b16 %v1156, %v1154
    %v1803 = vpack.c.b16 %v1157, %v1155
    %v1804 = vpack.c.b16 %v1160, %v1158
    %v1805 = vpack.c.b16 %v1161, %v1159
    %v1806 = vpack.c.b16 %v1164, %v1162
    %v1807 = vpack.c.b16 %v1165, %v1163
    %v1808 = vpack.c.b16 %v1168, %v1166
    %v1809 = vpack.c.b16 %v1169, %v1167
    %v1810 = vpack.c.b16 %v1172, %v1170
    %v1811 = vpack.c.b16 %v1173, %v1171
    %v1812 = vpack.c.b16 %v1176, %v1174
    %v1813 = vpack.c.b16 %v1177, %v1175
    %v1814 = vpack.c.b16 %v1180, %v1178
    %v1815 = vpack.c.b16 %v1181, %v1179
    %v1816 = vpack.c.b16 %v1184, %v1182
    %v1817 = vpack.c.b16 %v1185, %v1183
    %v1818 = vpack.c.b16 %v1188, %v1186
    %v1819 = vpack.c.b16 %v1189, %v1187
    %v1820 = vpack.c.b16 %v1192, %v1190
    %v1821 = vpack.c.b16 %v1193, %v1191
    %v1822 = vpack.c.b16 %v1196, %v1194
    %v1823 = vpack.c.b16 %v1197, %v1195
    %v1824 = vpack.c.b16 %v1200, %v1198
    %v1825 = vpack.c.b16 %v1201, %v1199
    %v1826 = vpack.c.b16 %v1204, %v1202
    %v1827 = vpack.c.b16 %v1205, %v1203
    %v1828 = vpack.c.b16 %v1208, %v1206
    %v1829 = vpack.c.b16 %v1209, %v1207
    %v1830 = vpack.c.b16 %v1212, %v1210
    %v1831 = vpack.c.b16 %v1213, %v1211
    %v1832 = vpack.c.b16 %v1216, %v1214
    %v1833 = vpack.c.b16 %v1217, %v1215
    %v1834 = vpack.c.b16 %v1220, %v1218
    %v1835 = vpack.c.b16 %v1221, %v1219
    %v1836 = vpack.c.b16 %v1224, %v1222
    %v1837 = vpack.c.b16 %v1225, %v1223
    %v1838 = vpack.c.b16 %v1228, %v1226
    %v1839 = vpack.c.b16 %v1229, %v1227
    %v1840 = vpack.c.b16 %v1232, %v1230
    %v1841 = vpack.c.b16 %v1233, %v1231
    %v1842 = vpack.c.b16 %v1236, %v1234
    %v1843 = vpack.c.b16 %v1237, %v1235
    %v1844 = vpack.c.b16 %v1240, %v1238
    %v1845 = vpack.c.b16 %v1241, %v1239
    %v1846 = vpack.c.b16 %v1244, %v1242
    %v1847 = vpack.c.b16 %v1245, %v1243
    %v1848 = vpack.c.b16 %v1248, %v1246
    %v1849 = vpack.c.b16 %v1249, %v1247
    %v1850 = vpack.c.b16 %v1252, %v1250
    %v1851 = vpack.c.b16 %v1253, %v1251
    %v1852 = vpack.c.b16 %v1256, %v1254
    %v1853 = vpack.c.b16 %v1257, %v1255
    %v1854 = vpack.c.b16 %v1260, %v1258
    %v1855 = vpack.c.b16 %v1261, %v1259
    %v1856 = vpack.c.b16 %v1264, %v1262
    %v1857 = vpack.c.b16 %v1265, %v1263
    %v1858 = vpack.c.b16 %v1268, %v1266
    %v1859 = vpack.c.b16 %v1269, %v1267
    %v1860 = vpack.c.b16 %v1272, %v1270
    %v1861 = vpack.c.b16 %v1273, %v1271
    %v1862 = vpack.c.b16 %v1276, %v1274
    %v1863 = vpack.c.b16 %v1277, %v1275
    %v1864 = vpack.c.b16 %v1280, %v1278
    %v1865 = vpack.c.b16 %v1281, %v1279
    %v1866 = vpack.c.b16 %v1284, %v1282
    %v1867 = vpack.c.b16 %v1285, %v1283
    %v1868 = vpack.c.b16 %v1288, %v1286
    %v1869 = vpack.c.b16 %v1289, %v1287
    %v1870 = vpack.c.b16 %v1292, %v1290
    %v1871 = vpack.c.b16 %v1293, %v1291
    %v1872 = vpack.c.b16 %v1296, %v1294
    %v1873 = vpack.c.b16 %v1297, %v1295
    %v1874 = vpack.c.b16 %v1300, %v1298
    %v1875 = vpack.c.b16 %v1301, %v1299
    %v1876 = vpack.c.b16 %v1304, %v1302
    %v1877 = vpack.c.b16 %v1305, %v1303
    %v1878 = vpack.c.b16 %v1308, %v1306
    %v1879 = vpack.c.b16 %v1309, %v1307
    %v1880 = vpack.c.b16 %v1312, %v1310
    %v1881 = vpack.c.b16 %v1313, %v1311
    %v1882 = vpack.c.b16 %v1316, %v1314
    %v1883 = vpack.c.b16 %v1317, %v1315
    %v1884 = vpack.c.b16 %v1320, %v1318
    %v1885 = vpack.c.b16 %v1321, %v1319
    %v1886 = vpack.c.b16 %v1324, %v1322
    %v1887 = vpack.c.b16 %v1325, %v1323
    %v1888 = vpack.c.b16 %v1328, %v1326
    %v1889 = vpack.c.b16 %v1329, %v1327
    %v1890 = vpack.c.b16 %v1332, %v1330
    %v1891 = vpack.c.b16 %v1333, %v1331
    %v1892 = vpack.c.b16 %v1336, %v1334
    %v1893 = vpack.c.b16 %v1337, %v1335
    %v1894 = vpack.c.b16 %v1340, %v1338
    %v1895 = vpack.c.b16 %v1341, %v1339
    %v1896 = vpack.c.b16 %v1344, %v1342
    %v1897 = vpack.c.b16 %v1345, %v1343
    %v1898 = vpack.c.b16 %v1348, %v1346
    %v1899 = vpack.c.b16 %v1349, %v1347
    %v1900 = vpack.c.b16 %v1352, %v1350
    %v1901 = vpack.c.b16 %v1353, %v1351
    %v1902 = vpack.c.b16 %v1356, %v1354
    %v1903 = vpack.c.b16 %v1357, %v1355
    %v1904 = vpack.c.b16 %v1360, %v1358
    %v1905 = vpack.c.b16 %v1361, %v1359
    %v1906 = vpack.c.b16 %v1364, %v1362
    %v1907 = vpack.c.b16 %v1365, %v1363
    %v1908 = vpack.c.b16 %v1368, %v1366
    %v1909 = vpack.c.b16 %v1369, %v1367
    %v1910 = vpack.c.b16 %v1372, %v1370
    %v1911 = vpack.c.b16 %v1373, %v1371
    %v1912 = vpack.c.b16 %v1376, %v1374
    %v1913 = vpack.c.b16 %v1377, %v1375
    %v1914 = vpack.c.b16 %v1380, %v1378
    %v1915 = vpack.c.b16 %v1381, %v1379
    %v1916 = vpack.c.b16 %v1384, %v1382
    %v1917 = vpack.c.b16 %v1385, %v1383
    %v1918 = vpack.c.b16 %v1388, %v1386
    %v1919 = vpack.c.b16 %v1389, %v1387
    %v1920 = vpack.c.b16 %v1392, %v1390
    %v1921 = vpack.c.b16 %v1393, %v1391
    %v1922 = vpack.c.b16 %v1396, %v1394
    %v1923 = vpack.c.b16 %v1397, %v1395
    %v1924 = vpack.c.b16 %v1400, %v1398
    %v1925 = vpack.c.b16 %v1401, %v1399
    %v1926 = vpack.c.b16 %v1404, %v1402
    %v1927 = vpack.c.b16 %v1405, %v1403
    %v1928 = vpack.c.b16 %v1408, %v1406
    %v1929 = vpack.c.b16 %v1409, %v1407
    %v1930 = vpack.c.b16 %v1412, %v1410
    %v1931 = vpack.c.b16 %v1413, %v1411
    %v1932 = vpack.c.b16 %v1416, %v1414
    %v1933 = vpack.c.b16 %v1417, %v1415
    %v1934 = vpack.c.b16 %v1420, %v1418
    %v1935 = vpack.c.b16 %v1421, %v1419
    %v1936 = vpack.c.b16 %v1424, %v1422
    %v1937 = vpack.c.b16 %v1425, %v1423
    %v1938 = vpack.c.b16 %v1428, %v1426
    %v1939 = vpack.c.b16 %v1429, %v1427
    %v1940 = vpack.c.b16 %v1432, %v1430
    %v1941 = vpack.c.b16 %v1433, %v1431
    %v1942 = vpack.c.b16 %v1436, %v1434
    %v1943 = vpack.c.b16 %v1437, %v1435
    %v1944 = vpack.c.b16 %v1440, %v1438
    %v1945 = vpack.c.b16 %v1441, %v1439
    %v1946 = vpack.c.b16 %v1444, %v1442
    %v1947 = vpack.c.b16 %v1445, %v1443
    %v1948 = vpack.c.b16 %v1448, %v1446
    %v1949 = vpack.c.b16 %v1449, %v1447
    %v1950 = vpack.c.b16 %v1452, %v1450
    %v1951 = vpack.c.b16 %v1453, %v1451
    %v1952 = vpack.c.b16 %v1456, %v1454
    %v1953 = vpack.c.b16 %v1457, %v1455
    %v1954 = vpack.c.b16 %v1460, %v1458
    %v1955 = vpack.c.b16 %v1461, %v1459
    %v1956 = vpack.c.b16 %v1464, %v1462
    %v1957 = vpack.c.b16 %v1465, %v1463
    %v1958 = vpack.c.b16 %v1468, %v1466
    %v1959 = vpack.c.b16 %v1469, %v1467
    %v1960 = vpack.c.b16 %v1472, %v1470
    %v1961 = vpack.c.b16 %v1473, %v1471
    %v1962 = vpack.c.b16 %v1476, %v1474
    %v1963 = vpack.c.b16 %v1477, %v1475
    %v1964 = vpack.c.b16 %v1480, %v1478
    %v1965 = vpack.c.b16 %v1481, %v1479
    %v1966 = vpack.c.b16 %v1484, %v1482
    %v1967 = vpack.c.b16 %v1485, %v1483
    %v1968 = vpack.c.b16 %v1488, %v1486
    %v1969 = vpack.c.b16 %v1489, %v1487
    %v1970 = vpack.c.b16 %v1492, %v1490
    %v1971 = vpack.c.b16 %v1493, %v1491
    %v1972 = vpack.c.b16 %v1496, %v1494
    %v1973 = vpack.c.b16 %v1497, %v1495
    %v1974 = vpack.c.b16 %v1500, %v1498
    %v1975 = vpack.c.b16 %v1501, %v1499
    %v1976 = vpack.c.b16 %v1504, %v1502
    %v1977 = vpack.c.b16 %v1505, %v1503
    %v1978 = vpack.c.b16 %v1508, %v1506
    %v1979 = vpack.c.b16 %v1509, %v1507
    %v1980 = vpack.c.b16 %v1512, %v1510
    %v1981 = vpack.c.b16 %v1513, %v1511
    %v1982 = vpack.c.b16 %v1516, %v1514
    %v1983 = vpack.c.b16 %v1517, %v1515
    %v1984 = vpack.c.b16 %v1520, %v1518
    %v1985 = vpack.c.b16 %v1521, %v1519
    %v1986 = vpack.c.b16 %v1524, %v1522
    %v1987 = vpack.c.b16 %v1525, %v1523
    %v1988 = vpack.c.b16 %v1528, %v1526
    %v1989 = vpack.c.b16 %v1529, %v1527
    %v1990 = vpack.c.b16 %v1532, %v1530
    %v1991 = vpack.c.b16 %v1533, %v1531
    %v1992 = vpack.c.b16 %v1536, %v1534
    %v1993 = vpack.c.b16 %v1537, %v1535
    %v1994 = vpack.c.b16 %v1540, %v1538
    %v1995 = vpack.c.b16 %v1541, %v1539
    %v1996 = vpack.c.b16 %v1544, %v1542
    %v1997 = vpack.c.b16 %v1545, %v1543
    %v1998 = vpack.c.b16 %v1548, %v1546
    %v1999 = vpack.c.b16 %v1549, %v1547
    %v2000 = vpack.c.b16 %v1552, %v1550
    %v2001 = vpack.c.b16 %v1553, %v1551
    %v2002 = vpack.c.b16 %v1556, %v1554
    %v2003 = vpack.c.b16 %v1557, %v1555
    %v2004 = vpack.c.b16 %v1560, %v1558
    %v2005 = vpack.c.b16 %v1561, %v1559
    %v2006 = vpack.c.b16 %v1564, %v1562
    %v2007 = vpack.c.b16 %v1565, %v1563
    %v2008 = vpack.c.b16 %v1568, %v1566
    %v2009 = vpack.c.b16 %v1569, %v1567
    %v2010 = vpack.c.b16 %v1572, %v1570
    %v2011 = vpack.c.b16 %v1573, %v1571
    %v2012 = vpack.c.b16 %v1576, %v1574
    %v2013 = vpack.c.b16 %v1577, %v1575
    %v2014 = vpack.c.b16 %v1580, %v1578
    %v2015 = vpack.c.b16 %v1581, %v1579
    %v2016 = vpack.c.b16 %v1584, %v1582
    %v2017 = vpack.c.b16 %v1585, %v1583
    %v2018 = vpack.c.b16 %v1588, %v1586
    %v2019 = vpack.c.b16 %v1589, %v1587
    %v2020 = vpack.c.b16 %v1592, %v1590
    %v2021 = vpack.c.b16 %v1593, %v1591
    %v2022 = vpack.c.b16 %v1596, %v1594
    %v2023 = vpack.c.b16 %v1597, %v1595
    %v2024 = vpack.c.b16 %v1600, %v1598
    %v2025 = vpack.c.b16 %v1601, %v1599
    %v2026 = vpack.c.b16 %v1604, %v1602
    %v2027 = vpack.c.b16 %v1605, %v1603
    %v2028 = vpack.c.b16 %v1608, %v1606
    %v2029 = vpack.c.b16 %v1609, %v1607
    %v2030 = vpack.c.b16 %v1612, %v1610
    %v2031 = vpack.c.b16 %v1613, %v1611
    %v2032 = vpack.c.b16 %v1616, %v1614
    %v2033 = vpack.c.b16 %v1617, %v1615
    %v2034 = vpack.c.b16 %v1620, %v1618
    %v2035 = vpack.c.b16 %v1621, %v1619
    %v2036 = vpack.c.b16 %v1624, %v1622
    %v2037 = vpack.c.b16 %v1625, %v1623
    %v2038 = vpack.c.b16 %v1628, %v1626
    %v2039 = vpack.c.b16 %v1629, %v1627
    %v2040 = vpack.c.b16 %v1632, %v1630
    %v2041 = vpack.c.b16 %v1633, %v1631
    %v2042 = vpack.c.b16 %v1636, %v1634
    %v2043 = vpack.c.b16 %v1637, %v1635
    %v2044 = vpack.c.b16 %v1640, %v1638
    %v2045 = vpack.c.b16 %v1641, %v1639
    %v2046 = vpack.c.b16 %v1644, %v1642
    %v2047 = vpack.c.b16 %v1645, %v1643
    %v2048 = vpack.c.b16 %v1648, %v1646
    %v2049 = vpack.c.b16 %v1649, %v1647
    %v2050 = vpack.c.b16 %v1652, %v1650
    %v2051 = vpack.c.b16 %v1653, %v1651
    %v2052 = vpack.c.b16 %v1656, %v1654
    %v2053 = vpack.c.b16 %v1657, %v1655
    %v2054 = vpack.c.b16 %v1660, %v1658
    %v2055 = vpack.c.b16 %v1661, %v1659
    %v2056 = vpack.c.b16 %v1664, %v1662
    %v2057 = vpack.c.b16 %v1665, %v1663
    %v2058 = vpack.c.b16 %v1668, %v1666
    %v2059 = vpack.c.b16 %v1669, %v1667
    %v2060 = vpack.c.b16 %v1672, %v1670
    %v2061 = vpack.c.b16 %v1673, %v1671
    %v2062 = vpack.c.b16 %v1676, %v1674
    %v2063 = vpack.c.b16 %v1677, %v1675
    %v2064 = vpack.c.b16 %v1680, %v1678
    %v2065 = vpack.c.b16 %v1681, %v1679
    %2450 = vmatpush.bf16.msra.mxu0 %v1696
    %2451 = vmatpush.bf16.msra.mxu0 %v1694
    %2452 = vmatpush.bf16.msra.mxu0 %v1692
    %2453 = vmatpush.bf16.msra.mxu0 %v1690
    %2454 = vmatpush.bf16.msra.mxu0 %v1688
    %2455 = vmatpush.bf16.msra.mxu0 %v1686
    %2456 = vmatpush.bf16.msra.mxu0 %v1684
    %2457 = vmatpush.bf16.msra.mxu0 %v1682
    %2458 = vmatmul.bf16.gmra.mxu0 %v482
    %v2459 = vpop.f32.mrf.mxu0
    %v2460 = vadd.f32 %v442, %v2459
    %v2461 = vpop.f32.mrf.mxu0
    %2462 = vdwg.mxu0
    %2463 = vmatpush.bf16.msra.mxu0 %v1712
    %2464 = vmatpush.bf16.msra.mxu0 %v1710
    %2465 = vmatpush.bf16.msra.mxu0 %v1708
    %2466 = vmatpush.bf16.msra.mxu0 %v1706
    %2467 = vmatpush.bf16.msra.mxu0 %v1704
    %2468 = vmatpush.bf16.msra.mxu0 %v1702
    %2469 = vmatpush.bf16.msra.mxu0 %v1700
    %2470 = vmatpush.bf16.msra.mxu0 %v1698
    %2471 = vmatmul.bf16.gmra.mxu0 %v483
    %v2472 = vpop.f32.mrf.mxu0
    %v2473 = vadd.f32 %v2460, %v2472
    %v2474 = vpop.f32.mrf.mxu0
    %2475 = vdwg.mxu0
    %2476 = vmatpush.bf16.msra.mxu0 %v1728
    %2477 = vmatpush.bf16.msra.mxu0 %v1726
    %2478 = vmatpush.bf16.msra.mxu0 %v1724
    %2479 = vmatpush.bf16.msra.mxu0 %v1722
    %2480 = vmatpush.bf16.msra.mxu0 %v1720
    %2481 = vmatpush.bf16.msra.mxu0 %v1718
    %2482 = vmatpush.bf16.msra.mxu0 %v1716
    %2483 = vmatpush.bf16.msra.mxu0 %v1714
    %2484 = vmatmul.bf16.gmra.mxu0 %v484
    %v2485 = vpop.f32.mrf.mxu0
    %v2486 = vadd.f32 %v2473, %v2485
    %v2487 = vpop.f32.mrf.mxu0
    %2488 = vdwg.mxu0
    %2489 = vmatpush.bf16.msra.mxu0 %v1744
    %2490 = vmatpush.bf16.msra.mxu0 %v1742
    %2491 = vmatpush.bf16.msra.mxu0 %v1740
    %2492 = vmatpush.bf16.msra.mxu0 %v1738
    %2493 = vmatpush.bf16.msra.mxu0 %v1736
    %2494 = vmatpush.bf16.msra.mxu0 %v1734
    %2495 = vmatpush.bf16.msra.mxu0 %v1732
    %2496 = vmatpush.bf16.msra.mxu0 %v1730
    %2497 = vmatmul.bf16.gmra.mxu0 %v485
    %v2498 = vpop.f32.mrf.mxu0
    %v2499 = vadd.f32 %v2486, %v2498
    %v2500 = vpop.f32.mrf.mxu0
    %2501 = vdwg.mxu0
    %2502 = vmatpush.bf16.msra.mxu0 %v1760
    %2503 = vmatpush.bf16.msra.mxu0 %v1758
    %2504 = vmatpush.bf16.msra.mxu0 %v1756
    %2505 = vmatpush.bf16.msra.mxu0 %v1754
    %2506 = vmatpush.bf16.msra.mxu0 %v1752
    %2507 = vmatpush.bf16.msra.mxu0 %v1750
    %2508 = vmatpush.bf16.msra.mxu0 %v1748
    %2509 = vmatpush.bf16.msra.mxu0 %v1746
    %2510 = vmatmul.bf16.gmra.mxu0 %v486
    %v2511 = vpop.f32.mrf.mxu0
    %v2512 = vadd.f32 %v2499, %v2511
    %v2513 = vpop.f32.mrf.mxu0
    %2514 = vdwg.mxu0
    %2515 = vmatpush.bf16.msra.mxu0 %v1776
    %2516 = vmatpush.bf16.msra.mxu0 %v1774
    %2517 = vmatpush.bf16.msra.mxu0 %v1772
    %2518 = vmatpush.bf16.msra.mxu0 %v1770
    %2519 = vmatpush.bf16.msra.mxu0 %v1768
    %2520 = vmatpush.bf16.msra.mxu0 %v1766
    %2521 = vmatpush.bf16.msra.mxu0 %v1764
    %2522 = vmatpush.bf16.msra.mxu0 %v1762
    %2523 = vmatmul.bf16.gmra.mxu0 %v487
    %v2524 = vpop.f32.mrf.mxu0
    %v2525 = vadd.f32 %v2512, %v2524
    %v2526 = vpop.f32.mrf.mxu0
    %2527 = vdwg.mxu0
    %2528 = vmatpush.bf16.msra.mxu0 %v1792
    %2529 = vmatpush.bf16.msra.mxu0 %v1790
    %2530 = vmatpush.bf16.msra.mxu0 %v1788
    %2531 = vmatpush.bf16.msra.mxu0 %v1786
    %2532 = vmatpush.bf16.msra.mxu0 %v1784
    %2533 = vmatpush.bf16.msra.mxu0 %v1782
    %2534 = vmatpush.bf16.msra.mxu0 %v1780
    %2535 = vmatpush.bf16.msra.mxu0 %v1778
    %2536 = vmatmul.bf16.gmra.mxu0 %v488
    %v2537 = vpop.f32.mrf.mxu0
    %v2538 = vadd.f32 %v2525, %v2537
    %v2539 = vpop.f32.mrf.mxu0
    %2540 = vdwg.mxu0
    %2541 = vmatpush.bf16.msra.mxu0 %v1808
    %2542 = vmatpush.bf16.msra.mxu0 %v1806
    %2543 = vmatpush.bf16.msra.mxu0 %v1804
    %2544 = vmatpush.bf16.msra.mxu0 %v1802
    %2545 = vmatpush.bf16.msra.mxu0 %v1800
    %2546 = vmatpush.bf16.msra.mxu0 %v1798
    %2547 = vmatpush.bf16.msra.mxu0 %v1796
    %2548 = vmatpush.bf16.msra.mxu0 %v1794
    %2549 = vmatmul.bf16.gmra.mxu0 %v489
    %v2550 = vpop.f32.mrf.mxu0
    %v2551 = vadd.f32 %v2538, %v2550
    %v2552 = vpop.f32.mrf.mxu0
    %2553 = vdwg.mxu0
    %2554 = vmatpush.bf16.msra.mxu0 %v1824
    %2555 = vmatpush.bf16.msra.mxu0 %v1822
    %2556 = vmatpush.bf16.msra.mxu0 %v1820
    %2557 = vmatpush.bf16.msra.mxu0 %v1818
    %2558 = vmatpush.bf16.msra.mxu0 %v1816
    %2559 = vmatpush.bf16.msra.mxu0 %v1814
    %2560 = vmatpush.bf16.msra.mxu0 %v1812
    %2561 = vmatpush.bf16.msra.mxu0 %v1810
    %2562 = vmatmul.bf16.gmra.mxu0 %v490
    %v2563 = vpop.f32.mrf.mxu0
    %v2564 = vadd.f32 %v2551, %v2563
    %v2565 = vpop.f32.mrf.mxu0
    %2566 = vdwg.mxu0
    %2567 = vmatpush.bf16.msra.mxu0 %v1840
    %2568 = vmatpush.bf16.msra.mxu0 %v1838
    %2569 = vmatpush.bf16.msra.mxu0 %v1836
    %2570 = vmatpush.bf16.msra.mxu0 %v1834
    %2571 = vmatpush.bf16.msra.mxu0 %v1832
    %2572 = vmatpush.bf16.msra.mxu0 %v1830
    %2573 = vmatpush.bf16.msra.mxu0 %v1828
    %2574 = vmatpush.bf16.msra.mxu0 %v1826
    %2575 = vmatmul.bf16.gmra.mxu0 %v491
    %v2576 = vpop.f32.mrf.mxu0
    %v2577 = vadd.f32 %v2564, %v2576
    %v2578 = vpop.f32.mrf.mxu0
    %2579 = vdwg.mxu0
    %2580 = vmatpush.bf16.msra.mxu0 %v1856
    %2581 = vmatpush.bf16.msra.mxu0 %v1854
    %2582 = vmatpush.bf16.msra.mxu0 %v1852
    %2583 = vmatpush.bf16.msra.mxu0 %v1850
    %2584 = vmatpush.bf16.msra.mxu0 %v1848
    %2585 = vmatpush.bf16.msra.mxu0 %v1846
    %2586 = vmatpush.bf16.msra.mxu0 %v1844
    %2587 = vmatpush.bf16.msra.mxu0 %v1842
    %2588 = vmatmul.bf16.gmra.mxu0 %v492
    %v2589 = vpop.f32.mrf.mxu0
    %v2590 = vadd.f32 %v2577, %v2589
    %v2591 = vpop.f32.mrf.mxu0
    %2592 = vdwg.mxu0
    %2593 = vmatpush.bf16.msra.mxu0 %v1872
    %2594 = vmatpush.bf16.msra.mxu0 %v1870
    %2595 = vmatpush.bf16.msra.mxu0 %v1868
    %2596 = vmatpush.bf16.msra.mxu0 %v1866
    %2597 = vmatpush.bf16.msra.mxu0 %v1864
    %2598 = vmatpush.bf16.msra.mxu0 %v1862
    %2599 = vmatpush.bf16.msra.mxu0 %v1860
    %2600 = vmatpush.bf16.msra.mxu0 %v1858
    %2601 = vmatmul.bf16.gmra.mxu0 %v493
    %v2602 = vpop.f32.mrf.mxu0
    %v2603 = vadd.f32 %v2590, %v2602
    %v2604 = vpop.f32.mrf.mxu0
    %2605 = vdwg.mxu0
    %2606 = vmatpush.bf16.msra.mxu0 %v1888
    %2607 = vmatpush.bf16.msra.mxu0 %v1886
    %2608 = vmatpush.bf16.msra.mxu0 %v1884
    %2609 = vmatpush.bf16.msra.mxu0 %v1882
    %2610 = vmatpush.bf16.msra.mxu0 %v1880
    %2611 = vmatpush.bf16.msra.mxu0 %v1878
    %2612 = vmatpush.bf16.msra.mxu0 %v1876
    %2613 = vmatpush.bf16.msra.mxu0 %v1874
    %2614 = vmatmul.bf16.gmra.mxu0 %v494
    %v2615 = vpop.f32.mrf.mxu0
    %v2616 = vadd.f32 %v2603, %v2615
    %v2617 = vpop.f32.mrf.mxu0
    %2618 = vdwg.mxu0
    %2619 = vmatpush.bf16.msra.mxu0 %v1904
    %2620 = vmatpush.bf16.msra.mxu0 %v1902
    %2621 = vmatpush.bf16.msra.mxu0 %v1900
    %2622 = vmatpush.bf16.msra.mxu0 %v1898
    %2623 = vmatpush.bf16.msra.mxu0 %v1896
    %2624 = vmatpush.bf16.msra.mxu0 %v1894
    %2625 = vmatpush.bf16.msra.mxu0 %v1892
    %2626 = vmatpush.bf16.msra.mxu0 %v1890
    %2627 = vmatmul.bf16.gmra.mxu0 %v495
    %v2628 = vpop.f32.mrf.mxu0
    %v2629 = vadd.f32 %v2616, %v2628
    %v2630 = vpop.f32.mrf.mxu0
    %2631 = vdwg.mxu0
    %2632 = vmatpush.bf16.msra.mxu0 %v1920
    %2633 = vmatpush.bf16.msra.mxu0 %v1918
    %2634 = vmatpush.bf16.msra.mxu0 %v1916
    %2635 = vmatpush.bf16.msra.mxu0 %v1914
    %2636 = vmatpush.bf16.msra.mxu0 %v1912
    %2637 = vmatpush.bf16.msra.mxu0 %v1910
    %2638 = vmatpush.bf16.msra.mxu0 %v1908
    %2639 = vmatpush.bf16.msra.mxu0 %v1906
    %2640 = vmatmul.bf16.gmra.mxu0 %v496
    %v2641 = vpop.f32.mrf.mxu0
    %v2642 = vadd.f32 %v2629, %v2641
    %v2643 = vpop.f32.mrf.mxu0
    %2644 = vdwg.mxu0
    %2645 = vmatpush.bf16.msra.mxu0 %v1936
    %2646 = vmatpush.bf16.msra.mxu0 %v1934
    %2647 = vmatpush.bf16.msra.mxu0 %v1932
    %2648 = vmatpush.bf16.msra.mxu0 %v1930
    %2649 = vmatpush.bf16.msra.mxu0 %v1928
    %2650 = vmatpush.bf16.msra.mxu0 %v1926
    %2651 = vmatpush.bf16.msra.mxu0 %v1924
    %2652 = vmatpush.bf16.msra.mxu0 %v1922
    %2653 = vmatmul.bf16.gmra.mxu0 %v497
    %v2654 = vpop.f32.mrf.mxu0
    %v2655 = vadd.f32 %v2642, %v2654
    %v2656 = vpop.f32.mrf.mxu0
    %2657 = vdwg.mxu0
    %2658 = vmatpush.bf16.msra.mxu0 %v1952
    %2659 = vmatpush.bf16.msra.mxu0 %v1950
    %2660 = vmatpush.bf16.msra.mxu0 %v1948
    %2661 = vmatpush.bf16.msra.mxu0 %v1946
    %2662 = vmatpush.bf16.msra.mxu0 %v1944
    %2663 = vmatpush.bf16.msra.mxu0 %v1942
    %2664 = vmatpush.bf16.msra.mxu0 %v1940
    %2665 = vmatpush.bf16.msra.mxu0 %v1938
    %2666 = vmatmul.bf16.gmra.mxu0 %v498
    %v2667 = vpop.f32.mrf.mxu0
    %v2668 = vadd.f32 %v2655, %v2667
    %v2669 = vpop.f32.mrf.mxu0
    %2670 = vdwg.mxu0
    %2671 = vmatpush.bf16.msra.mxu0 %v1968
    %2672 = vmatpush.bf16.msra.mxu0 %v1966
    %2673 = vmatpush.bf16.msra.mxu0 %v1964
    %2674 = vmatpush.bf16.msra.mxu0 %v1962
    %2675 = vmatpush.bf16.msra.mxu0 %v1960
    %2676 = vmatpush.bf16.msra.mxu0 %v1958
    %2677 = vmatpush.bf16.msra.mxu0 %v1956
    %2678 = vmatpush.bf16.msra.mxu0 %v1954
    %2679 = vmatmul.bf16.gmra.mxu0 %v499
    %v2680 = vpop.f32.mrf.mxu0
    %v2681 = vadd.f32 %v2668, %v2680
    %v2682 = vpop.f32.mrf.mxu0
    %2683 = vdwg.mxu0
    %2684 = vmatpush.bf16.msra.mxu0 %v1984
    %2685 = vmatpush.bf16.msra.mxu0 %v1982
    %2686 = vmatpush.bf16.msra.mxu0 %v1980
    %2687 = vmatpush.bf16.msra.mxu0 %v1978
    %2688 = vmatpush.bf16.msra.mxu0 %v1976
    %2689 = vmatpush.bf16.msra.mxu0 %v1974
    %2690 = vmatpush.bf16.msra.mxu0 %v1972
    %2691 = vmatpush.bf16.msra.mxu0 %v1970
    %2692 = vmatmul.bf16.gmra.mxu0 %v500
    %v2693 = vpop.f32.mrf.mxu0
    %v2694 = vadd.f32 %v2681, %v2693
    %v2695 = vpop.f32.mrf.mxu0
    %2696 = vdwg.mxu0
    %2697 = vmatpush.bf16.msra.mxu0 %v2000
    %2698 = vmatpush.bf16.msra.mxu0 %v1998
    %2699 = vmatpush.bf16.msra.mxu0 %v1996
    %2700 = vmatpush.bf16.msra.mxu0 %v1994
    %2701 = vmatpush.bf16.msra.mxu0 %v1992
    %2702 = vmatpush.bf16.msra.mxu0 %v1990
    %2703 = vmatpush.bf16.msra.mxu0 %v1988
    %2704 = vmatpush.bf16.msra.mxu0 %v1986
    %2705 = vmatmul.bf16.gmra.mxu0 %v501
    %v2706 = vpop.f32.mrf.mxu0
    %v2707 = vadd.f32 %v2694, %v2706
    %v2708 = vpop.f32.mrf.mxu0
    %2709 = vdwg.mxu0
    %2710 = vmatpush.bf16.msra.mxu0 %v2016
    %2711 = vmatpush.bf16.msra.mxu0 %v2014
    %2712 = vmatpush.bf16.msra.mxu0 %v2012
    %2713 = vmatpush.bf16.msra.mxu0 %v2010
    %2714 = vmatpush.bf16.msra.mxu0 %v2008
    %2715 = vmatpush.bf16.msra.mxu0 %v2006
    %2716 = vmatpush.bf16.msra.mxu0 %v2004
    %2717 = vmatpush.bf16.msra.mxu0 %v2002
    %2718 = vmatmul.bf16.gmra.mxu0 %v502
    %v2719 = vpop.f32.mrf.mxu0
    %v2720 = vadd.f32 %v2707, %v2719
    %v2721 = vpop.f32.mrf.mxu0
    %2722 = vdwg.mxu0
    %2723 = vmatpush.bf16.msra.mxu0 %v2032
    %2724 = vmatpush.bf16.msra.mxu0 %v2030
    %2725 = vmatpush.bf16.msra.mxu0 %v2028
    %2726 = vmatpush.bf16.msra.mxu0 %v2026
    %2727 = vmatpush.bf16.msra.mxu0 %v2024
    %2728 = vmatpush.bf16.msra.mxu0 %v2022
    %2729 = vmatpush.bf16.msra.mxu0 %v2020
    %2730 = vmatpush.bf16.msra.mxu0 %v2018
    %2731 = vmatmul.bf16.gmra.mxu0 %v503
    %v2732 = vpop.f32.mrf.mxu0
    %v2733 = vadd.f32 %v2720, %v2732
    %v2734 = vpop.f32.mrf.mxu0
    %2735 = vdwg.mxu0
    %2736 = vmatpush.bf16.msra.mxu0 %v2048
    %2737 = vmatpush.bf16.msra.mxu0 %v2046
    %2738 = vmatpush.bf16.msra.mxu0 %v2044
    %2739 = vmatpush.bf16.msra.mxu0 %v2042
    %2740 = vmatpush.bf16.msra.mxu0 %v2040
    %2741 = vmatpush.bf16.msra.mxu0 %v2038
    %2742 = vmatpush.bf16.msra.mxu0 %v2036
    %2743 = vmatpush.bf16.msra.mxu0 %v2034
    %2744 = vmatmul.bf16.gmra.mxu0 %v504
    %v2745 = vpop.f32.mrf.mxu0
    %v2746 = vadd.f32 %v2733, %v2745
    %v2747 = vpop.f32.mrf.mxu0
    %2748 = vdwg.mxu0
    %2749 = vmatpush.bf16.msra.mxu0 %v2064
    %2750 = vmatpush.bf16.msra.mxu0 %v2062
    %2751 = vmatpush.bf16.msra.mxu0 %v2060
    %2752 = vmatpush.bf16.msra.mxu0 %v2058
    %2753 = vmatpush.bf16.msra.mxu0 %v2056
    %2754 = vmatpush.bf16.msra.mxu0 %v2054
    %2755 = vmatpush.bf16.msra.mxu0 %v2052
    %2756 = vmatpush.bf16.msra.mxu0 %v2050
    %2757 = vmatmul.bf16.gmra.mxu0 %v505
    %v2758 = vpop.f32.mrf.mxu0
    %v2759 = vadd.f32 %v2746, %v2758
    %v2760 = vpop.f32.mrf.mxu0
    %2761 = vdwg.mxu0
    %2762 = vmatpush.bf16.msra.mxu0 %v1697
    %2763 = vmatpush.bf16.msra.mxu0 %v1695
    %2764 = vmatpush.bf16.msra.mxu0 %v1693
    %2765 = vmatpush.bf16.msra.mxu0 %v1691
    %2766 = vmatpush.bf16.msra.mxu0 %v1689
    %2767 = vmatpush.bf16.msra.mxu0 %v1687
    %2768 = vmatpush.bf16.msra.mxu0 %v1685
    %2769 = vmatpush.bf16.msra.mxu0 %v1683
    %2770 = vmatmul.bf16.gmra.mxu0 %v482
    %v2771 = vpop.f32.mrf.mxu0
    %v2772 = vadd.f32 %v443, %v2771
    %v2773 = vpop.f32.mrf.mxu0
    %2774 = vdwg.mxu0
    %2775 = vmatpush.bf16.msra.mxu0 %v1713
    %2776 = vmatpush.bf16.msra.mxu0 %v1711
    %2777 = vmatpush.bf16.msra.mxu0 %v1709
    %2778 = vmatpush.bf16.msra.mxu0 %v1707
    %2779 = vmatpush.bf16.msra.mxu0 %v1705
    %2780 = vmatpush.bf16.msra.mxu0 %v1703
    %2781 = vmatpush.bf16.msra.mxu0 %v1701
    %2782 = vmatpush.bf16.msra.mxu0 %v1699
    %2783 = vmatmul.bf16.gmra.mxu0 %v483
    %v2784 = vpop.f32.mrf.mxu0
    %v2785 = vadd.f32 %v2772, %v2784
    %v2786 = vpop.f32.mrf.mxu0
    %2787 = vdwg.mxu0
    %2788 = vmatpush.bf16.msra.mxu0 %v1729
    %2789 = vmatpush.bf16.msra.mxu0 %v1727
    %2790 = vmatpush.bf16.msra.mxu0 %v1725
    %2791 = vmatpush.bf16.msra.mxu0 %v1723
    %2792 = vmatpush.bf16.msra.mxu0 %v1721
    %2793 = vmatpush.bf16.msra.mxu0 %v1719
    %2794 = vmatpush.bf16.msra.mxu0 %v1717
    %2795 = vmatpush.bf16.msra.mxu0 %v1715
    %2796 = vmatmul.bf16.gmra.mxu0 %v484
    %v2797 = vpop.f32.mrf.mxu0
    %v2798 = vadd.f32 %v2785, %v2797
    %v2799 = vpop.f32.mrf.mxu0
    %2800 = vdwg.mxu0
    %2801 = vmatpush.bf16.msra.mxu0 %v1745
    %2802 = vmatpush.bf16.msra.mxu0 %v1743
    %2803 = vmatpush.bf16.msra.mxu0 %v1741
    %2804 = vmatpush.bf16.msra.mxu0 %v1739
    %2805 = vmatpush.bf16.msra.mxu0 %v1737
    %2806 = vmatpush.bf16.msra.mxu0 %v1735
    %2807 = vmatpush.bf16.msra.mxu0 %v1733
    %2808 = vmatpush.bf16.msra.mxu0 %v1731
    %2809 = vmatmul.bf16.gmra.mxu0 %v485
    %v2810 = vpop.f32.mrf.mxu0
    %v2811 = vadd.f32 %v2798, %v2810
    %v2812 = vpop.f32.mrf.mxu0
    %2813 = vdwg.mxu0
    %2814 = vmatpush.bf16.msra.mxu0 %v1761
    %2815 = vmatpush.bf16.msra.mxu0 %v1759
    %2816 = vmatpush.bf16.msra.mxu0 %v1757
    %2817 = vmatpush.bf16.msra.mxu0 %v1755
    %2818 = vmatpush.bf16.msra.mxu0 %v1753
    %2819 = vmatpush.bf16.msra.mxu0 %v1751
    %2820 = vmatpush.bf16.msra.mxu0 %v1749
    %2821 = vmatpush.bf16.msra.mxu0 %v1747
    %2822 = vmatmul.bf16.gmra.mxu0 %v486
    %v2823 = vpop.f32.mrf.mxu0
    %v2824 = vadd.f32 %v2811, %v2823
    %v2825 = vpop.f32.mrf.mxu0
    %2826 = vdwg.mxu0
    %2827 = vmatpush.bf16.msra.mxu0 %v1777
    %2828 = vmatpush.bf16.msra.mxu0 %v1775
    %2829 = vmatpush.bf16.msra.mxu0 %v1773
    %2830 = vmatpush.bf16.msra.mxu0 %v1771
    %2831 = vmatpush.bf16.msra.mxu0 %v1769
    %2832 = vmatpush.bf16.msra.mxu0 %v1767
    %2833 = vmatpush.bf16.msra.mxu0 %v1765
    %2834 = vmatpush.bf16.msra.mxu0 %v1763
    %2835 = vmatmul.bf16.gmra.mxu0 %v487
    %v2836 = vpop.f32.mrf.mxu0
    %v2837 = vadd.f32 %v2824, %v2836
    %v2838 = vpop.f32.mrf.mxu0
    %2839 = vdwg.mxu0
    %2840 = vmatpush.bf16.msra.mxu0 %v1793
    %2841 = vmatpush.bf16.msra.mxu0 %v1791
    %2842 = vmatpush.bf16.msra.mxu0 %v1789
    %2843 = vmatpush.bf16.msra.mxu0 %v1787
    %2844 = vmatpush.bf16.msra.mxu0 %v1785
    %2845 = vmatpush.bf16.msra.mxu0 %v1783
    %2846 = vmatpush.bf16.msra.mxu0 %v1781
    %2847 = vmatpush.bf16.msra.mxu0 %v1779
    %2848 = vmatmul.bf16.gmra.mxu0 %v488
    %v2849 = vpop.f32.mrf.mxu0
    %v2850 = vadd.f32 %v2837, %v2849
    %v2851 = vpop.f32.mrf.mxu0
    %2852 = vdwg.mxu0
    %2853 = vmatpush.bf16.msra.mxu0 %v1809
    %2854 = vmatpush.bf16.msra.mxu0 %v1807
    %2855 = vmatpush.bf16.msra.mxu0 %v1805
    %2856 = vmatpush.bf16.msra.mxu0 %v1803
    %2857 = vmatpush.bf16.msra.mxu0 %v1801
    %2858 = vmatpush.bf16.msra.mxu0 %v1799
    %2859 = vmatpush.bf16.msra.mxu0 %v1797
    %2860 = vmatpush.bf16.msra.mxu0 %v1795
    %2861 = vmatmul.bf16.gmra.mxu0 %v489
    %v2862 = vpop.f32.mrf.mxu0
    %v2863 = vadd.f32 %v2850, %v2862
    %v2864 = vpop.f32.mrf.mxu0
    %2865 = vdwg.mxu0
    %2866 = vmatpush.bf16.msra.mxu0 %v1825
    %2867 = vmatpush.bf16.msra.mxu0 %v1823
    %2868 = vmatpush.bf16.msra.mxu0 %v1821
    %2869 = vmatpush.bf16.msra.mxu0 %v1819
    %2870 = vmatpush.bf16.msra.mxu0 %v1817
    %2871 = vmatpush.bf16.msra.mxu0 %v1815
    %2872 = vmatpush.bf16.msra.mxu0 %v1813
    %2873 = vmatpush.bf16.msra.mxu0 %v1811
    %2874 = vmatmul.bf16.gmra.mxu0 %v490
    %v2875 = vpop.f32.mrf.mxu0
    %v2876 = vadd.f32 %v2863, %v2875
    %v2877 = vpop.f32.mrf.mxu0
    %2878 = vdwg.mxu0
    %2879 = vmatpush.bf16.msra.mxu0 %v1841
    %2880 = vmatpush.bf16.msra.mxu0 %v1839
    %2881 = vmatpush.bf16.msra.mxu0 %v1837
    %2882 = vmatpush.bf16.msra.mxu0 %v1835
    %2883 = vmatpush.bf16.msra.mxu0 %v1833
    %2884 = vmatpush.bf16.msra.mxu0 %v1831
    %2885 = vmatpush.bf16.msra.mxu0 %v1829
    %2886 = vmatpush.bf16.msra.mxu0 %v1827
    %2887 = vmatmul.bf16.gmra.mxu0 %v491
    %v2888 = vpop.f32.mrf.mxu0
    %v2889 = vadd.f32 %v2876, %v2888
    %v2890 = vpop.f32.mrf.mxu0
    %2891 = vdwg.mxu0
    %2892 = vmatpush.bf16.msra.mxu0 %v1857
    %2893 = vmatpush.bf16.msra.mxu0 %v1855
    %2894 = vmatpush.bf16.msra.mxu0 %v1853
    %2895 = vmatpush.bf16.msra.mxu0 %v1851
    %2896 = vmatpush.bf16.msra.mxu0 %v1849
    %2897 = vmatpush.bf16.msra.mxu0 %v1847
    %2898 = vmatpush.bf16.msra.mxu0 %v1845
    %2899 = vmatpush.bf16.msra.mxu0 %v1843
    %2900 = vmatmul.bf16.gmra.mxu0 %v492
    %v2901 = vpop.f32.mrf.mxu0
    %v2902 = vadd.f32 %v2889, %v2901
    %v2903 = vpop.f32.mrf.mxu0
    %2904 = vdwg.mxu0
    %2905 = vmatpush.bf16.msra.mxu0 %v1873
    %2906 = vmatpush.bf16.msra.mxu0 %v1871
    %2907 = vmatpush.bf16.msra.mxu0 %v1869
    %2908 = vmatpush.bf16.msra.mxu0 %v1867
    %2909 = vmatpush.bf16.msra.mxu0 %v1865
    %2910 = vmatpush.bf16.msra.mxu0 %v1863
    %2911 = vmatpush.bf16.msra.mxu0 %v1861
    %2912 = vmatpush.bf16.msra.mxu0 %v1859
    %2913 = vmatmul.bf16.gmra.mxu0 %v493
    %v2914 = vpop.f32.mrf.mxu0
    %v2915 = vadd.f32 %v2902, %v2914
    %v2916 = vpop.f32.mrf.mxu0
    %2917 = vdwg.mxu0
    %2918 = vmatpush.bf16.msra.mxu0 %v1889
    %2919 = vmatpush.bf16.msra.mxu0 %v1887
    %2920 = vmatpush.bf16.msra.mxu0 %v1885
    %2921 = vmatpush.bf16.msra.mxu0 %v1883
    %2922 = vmatpush.bf16.msra.mxu0 %v1881
    %2923 = vmatpush.bf16.msra.mxu0 %v1879
    %2924 = vmatpush.bf16.msra.mxu0 %v1877
    %2925 = vmatpush.bf16.msra.mxu0 %v1875
    %2926 = vmatmul.bf16.gmra.mxu0 %v494
    %v2927 = vpop.f32.mrf.mxu0
    %v2928 = vadd.f32 %v2915, %v2927
    %v2929 = vpop.f32.mrf.mxu0
    %2930 = vdwg.mxu0
    %2931 = vmatpush.bf16.msra.mxu0 %v1905
    %2932 = vmatpush.bf16.msra.mxu0 %v1903
    %2933 = vmatpush.bf16.msra.mxu0 %v1901
    %2934 = vmatpush.bf16.msra.mxu0 %v1899
    %2935 = vmatpush.bf16.msra.mxu0 %v1897
    %2936 = vmatpush.bf16.msra.mxu0 %v1895
    %2937 = vmatpush.bf16.msra.mxu0 %v1893
    %2938 = vmatpush.bf16.msra.mxu0 %v1891
    %2939 = vmatmul.bf16.gmra.mxu0 %v495
    %v2940 = vpop.f32.mrf.mxu0
    %v2941 = vadd.f32 %v2928, %v2940
    %v2942 = vpop.f32.mrf.mxu0
    %2943 = vdwg.mxu0
    %2944 = vmatpush.bf16.msra.mxu0 %v1921
    %2945 = vmatpush.bf16.msra.mxu0 %v1919
    %2946 = vmatpush.bf16.msra.mxu0 %v1917
    %2947 = vmatpush.bf16.msra.mxu0 %v1915
    %2948 = vmatpush.bf16.msra.mxu0 %v1913
    %2949 = vmatpush.bf16.msra.mxu0 %v1911
    %2950 = vmatpush.bf16.msra.mxu0 %v1909
    %2951 = vmatpush.bf16.msra.mxu0 %v1907
    %2952 = vmatmul.bf16.gmra.mxu0 %v496
    %v2953 = vpop.f32.mrf.mxu0
    %v2954 = vadd.f32 %v2941, %v2953
    %v2955 = vpop.f32.mrf.mxu0
    %2956 = vdwg.mxu0
    %2957 = vmatpush.bf16.msra.mxu0 %v1937
    %2958 = vmatpush.bf16.msra.mxu0 %v1935
    %2959 = vmatpush.bf16.msra.mxu0 %v1933
    %2960 = vmatpush.bf16.msra.mxu0 %v1931
    %2961 = vmatpush.bf16.msra.mxu0 %v1929
    %2962 = vmatpush.bf16.msra.mxu0 %v1927
    %2963 = vmatpush.bf16.msra.mxu0 %v1925
    %2964 = vmatpush.bf16.msra.mxu0 %v1923
    %2965 = vmatmul.bf16.gmra.mxu0 %v497
    %v2966 = vpop.f32.mrf.mxu0
    %v2967 = vadd.f32 %v2954, %v2966
    %v2968 = vpop.f32.mrf.mxu0
    %2969 = vdwg.mxu0
    %2970 = vmatpush.bf16.msra.mxu0 %v1953
    %2971 = vmatpush.bf16.msra.mxu0 %v1951
    %2972 = vmatpush.bf16.msra.mxu0 %v1949
    %2973 = vmatpush.bf16.msra.mxu0 %v1947
    %2974 = vmatpush.bf16.msra.mxu0 %v1945
    %2975 = vmatpush.bf16.msra.mxu0 %v1943
    %2976 = vmatpush.bf16.msra.mxu0 %v1941
    %2977 = vmatpush.bf16.msra.mxu0 %v1939
    %2978 = vmatmul.bf16.gmra.mxu0 %v498
    %v2979 = vpop.f32.mrf.mxu0
    %v2980 = vadd.f32 %v2967, %v2979
    %v2981 = vpop.f32.mrf.mxu0
    %2982 = vdwg.mxu0
    %2983 = vmatpush.bf16.msra.mxu0 %v1969
    %2984 = vmatpush.bf16.msra.mxu0 %v1967
    %2985 = vmatpush.bf16.msra.mxu0 %v1965
    %2986 = vmatpush.bf16.msra.mxu0 %v1963
    %2987 = vmatpush.bf16.msra.mxu0 %v1961
    %2988 = vmatpush.bf16.msra.mxu0 %v1959
    %2989 = vmatpush.bf16.msra.mxu0 %v1957
    %2990 = vmatpush.bf16.msra.mxu0 %v1955
    %2991 = vmatmul.bf16.gmra.mxu0 %v499
    %v2992 = vpop.f32.mrf.mxu0
    %v2993 = vadd.f32 %v2980, %v2992
    %v2994 = vpop.f32.mrf.mxu0
    %2995 = vdwg.mxu0
    %2996 = vmatpush.bf16.msra.mxu0 %v1985
    %2997 = vmatpush.bf16.msra.mxu0 %v1983
    %2998 = vmatpush.bf16.msra.mxu0 %v1981
    %2999 = vmatpush.bf16.msra.mxu0 %v1979
    %3000 = vmatpush.bf16.msra.mxu0 %v1977
    %3001 = vmatpush.bf16.msra.mxu0 %v1975
    %3002 = vmatpush.bf16.msra.mxu0 %v1973
    %3003 = vmatpush.bf16.msra.mxu0 %v1971
    %3004 = vmatmul.bf16.gmra.mxu0 %v500
    %v3005 = vpop.f32.mrf.mxu0
    %v3006 = vadd.f32 %v2993, %v3005
    %v3007 = vpop.f32.mrf.mxu0
    %3008 = vdwg.mxu0
    %3009 = vmatpush.bf16.msra.mxu0 %v2001
    %3010 = vmatpush.bf16.msra.mxu0 %v1999
    %3011 = vmatpush.bf16.msra.mxu0 %v1997
    %3012 = vmatpush.bf16.msra.mxu0 %v1995
    %3013 = vmatpush.bf16.msra.mxu0 %v1993
    %3014 = vmatpush.bf16.msra.mxu0 %v1991
    %3015 = vmatpush.bf16.msra.mxu0 %v1989
    %3016 = vmatpush.bf16.msra.mxu0 %v1987
    %3017 = vmatmul.bf16.gmra.mxu0 %v501
    %v3018 = vpop.f32.mrf.mxu0
    %v3019 = vadd.f32 %v3006, %v3018
    %v3020 = vpop.f32.mrf.mxu0
    %3021 = vdwg.mxu0
    %3022 = vmatpush.bf16.msra.mxu0 %v2017
    %3023 = vmatpush.bf16.msra.mxu0 %v2015
    %3024 = vmatpush.bf16.msra.mxu0 %v2013
    %3025 = vmatpush.bf16.msra.mxu0 %v2011
    %3026 = vmatpush.bf16.msra.mxu0 %v2009
    %3027 = vmatpush.bf16.msra.mxu0 %v2007
    %3028 = vmatpush.bf16.msra.mxu0 %v2005
    %3029 = vmatpush.bf16.msra.mxu0 %v2003
    %3030 = vmatmul.bf16.gmra.mxu0 %v502
    %v3031 = vpop.f32.mrf.mxu0
    %v3032 = vadd.f32 %v3019, %v3031
    %v3033 = vpop.f32.mrf.mxu0
    %3034 = vdwg.mxu0
    %3035 = vmatpush.bf16.msra.mxu0 %v2033
    %3036 = vmatpush.bf16.msra.mxu0 %v2031
    %3037 = vmatpush.bf16.msra.mxu0 %v2029
    %3038 = vmatpush.bf16.msra.mxu0 %v2027
    %3039 = vmatpush.bf16.msra.mxu0 %v2025
    %3040 = vmatpush.bf16.msra.mxu0 %v2023
    %3041 = vmatpush.bf16.msra.mxu0 %v2021
    %3042 = vmatpush.bf16.msra.mxu0 %v2019
    %3043 = vmatmul.bf16.gmra.mxu0 %v503
    %v3044 = vpop.f32.mrf.mxu0
    %v3045 = vadd.f32 %v3032, %v3044
    %v3046 = vpop.f32.mrf.mxu0
    %3047 = vdwg.mxu0
    %3048 = vmatpush.bf16.msra.mxu0 %v2049
    %3049 = vmatpush.bf16.msra.mxu0 %v2047
    %3050 = vmatpush.bf16.msra.mxu0 %v2045
    %3051 = vmatpush.bf16.msra.mxu0 %v2043
    %3052 = vmatpush.bf16.msra.mxu0 %v2041
    %3053 = vmatpush.bf16.msra.mxu0 %v2039
    %3054 = vmatpush.bf16.msra.mxu0 %v2037
    %3055 = vmatpush.bf16.msra.mxu0 %v2035
    %3056 = vmatmul.bf16.gmra.mxu0 %v504
    %v3057 = vpop.f32.mrf.mxu0
    %v3058 = vadd.f32 %v3045, %v3057
    %v3059 = vpop.f32.mrf.mxu0
    %3060 = vdwg.mxu0
    %3061 = vmatpush.bf16.msra.mxu0 %v2065
    %3062 = vmatpush.bf16.msra.mxu0 %v2063
    %3063 = vmatpush.bf16.msra.mxu0 %v2061
    %3064 = vmatpush.bf16.msra.mxu0 %v2059
    %3065 = vmatpush.bf16.msra.mxu0 %v2057
    %3066 = vmatpush.bf16.msra.mxu0 %v2055
    %3067 = vmatpush.bf16.msra.mxu0 %v2053
    %3068 = vmatpush.bf16.msra.mxu0 %v2051
    %3069 = vmatmul.bf16.gmra.mxu0 %v505
    %v3070 = vpop.f32.mrf.mxu0
    %v3071 = vadd.f32 %v3058, %v3070
    %v3072 = vpop.f32.mrf.mxu0
    %3073 = vdwg.mxu0
    %3074 = vst [vmem:[%s3] sm:$0xff] %v2759
    %3075 = vst [vmem:[%s3 + $0x8] sm:$0xff] %v3071
    // Predicated region
    $region22: #{fused_linear_heads.1} parent=1 // pred_check
      _
    $region23: #{fused_linear_heads.1} parent=1 // pred_check_branch
      %3077 = sbr.rel (0) target = $region25
    $region24: #{fused_linear_heads.1} parent=1 // pred_region
      _
    $region25: #{fused_linear_heads.1} parent=1 // pred_fallthru
      _
    // Predicated region
    $region26: #{fused_linear_heads.1} parent=1 // pred_check
      _
    $region27: #{fused_linear_heads.1} parent=1 // pred_check_branch
      %3079 = sbr.rel (0) target = $region29
    $region28: #{fused_linear_heads.1} parent=1 // pred_region
      _
    $region29: #{fused_linear_heads.1} parent=1 // pred_fallthru
      _
    %3080 = vsyncpa [#allocation3], 1
    %3081 = vsyncpa [#allocation5], 1

</llo_original>
